<compile_context>
chip_gen: v6e
topology: v6e:2x2x1
jax: 0.10.0
libtpu: 0.0.40
codegen_flags: <defaults>
</compile_context>

<pallas_src>
import functools

import jax
import jax.numpy as jnp
from jax.experimental import pallas as pl
from jax.experimental.pallas import tpu as pltpu


def _gcn_net_kernel(a_ref, x_ref, w_ref, b_ref, p_ref, out_ref, *, num_layers):
    """Whole network in one kernel (small shapes, everything resident in VMEM).

    a_ref : (Np, Np)     dense adjacency (bf16 edge counts, target x source)
    x_ref : (Np, C_in)   input node features (zero-padded rows), f32
    w_ref : (L, C, C)    stacked GCN weights, layer l maps h @ w_ref[l], f32
    b_ref : (L, C)       stacked GCN biases, f32
    p_ref : (B_pad, Np)  mean-pooling matrix (zero weight on padded nodes)
    out   : (B_pad, C)   pooled graph embeddings (rows >= num_graphs are junk)
    """
    # bf16 integer edge counts (<= 256) are exactly representable -> lossless.
    a = a_ref[...].astype(jnp.float32)
    h = x_ref[...]
    for l in range(num_layers):
        w = w_ref[l]                      # (C_in, C_out)
        bias = b_ref[pl.ds(l, 1), :]      # (1, C_out), broadcasts over nodes
        # GCNConv(normalize=False): out[i] = sum_{j->i} (x_j @ W) + bias
        h = jnp.dot(h, w, preferred_element_type=jnp.float32)
        h = jnp.dot(a, h, preferred_element_type=jnp.float32) + bias
        h = jnp.maximum(h, 0.0)           # ReLU
    # global_mean_pool
    out_ref[...] = jnp.dot(p_ref[...], h, preferred_element_type=jnp.float32)


def _round_up(x, m):
    return ((x + m - 1) // m) * m


@functools.partial(jax.jit, static_argnames=("num_graphs",))
def gcn_net1_forward(x, edge_index, batch, weights, biases, num_graphs):
    """JAX glue: build dense adjacency / pooling matrices (MXU-friendly,
    no scatter), pad the node dim to 128 and the graph dim to 8, call the
    kernel, slice the result.

    x          : (N, C_in) float32 node features
    edge_index : (2, E) int32, row 0 = source, row 1 = target
    batch      : (N,) int32 graph id per node
    weights    : (L, C, C) float32 stacked GCN weights (in x out)
    biases     : (L, C) float32 stacked GCN biases
    """
    n_nodes, c_in = x.shape
    num_layers, _, c_out = weights.shape

    # ---- pad node dimension to a multiple of 128 (lane / MXU alignment) ----
    n_pad = _round_up(n_nodes, 128)
    pad = n_pad - n_nodes
    x_p = jnp.pad(x, ((0, pad), (0, 0)))
    batch_p = jnp.concatenate(
        [batch, jnp.full((pad,), -1, jnp.int32)]) if pad else batch

    # ---- dense adjacency via bf16 one-hot matmul (no XLA scatter) ----------
    # adj[i, j] = #edges with dst == i, src == j.  One-hots are 0/1 and the
    # accumulation is f32, so the integer counts are exact; bf16 storage is
    # exact for counts <= 256 (trivially true for the graphs here).
    src = edge_index[0]
    dst = edge_index[1]
    node_ids = jnp.arange(n_pad, dtype=jnp.int32)
    src_oh = (src[:, None] == node_ids[None, :]).astype(jnp.bfloat16)  # (E, Np)
    dst_oh = (node_ids[:, None] == dst[None, :]).astype(jnp.bfloat16)  # (Np, E)
    adj = jnp.dot(dst_oh, src_oh,
                  preferred_element_type=jnp.float32).astype(jnp.bfloat16)

    # ---- mean-pooling matrix P: (B_pad, Np), B_pad padded to sublane=8 -----
    b_pad = max(_round_up(num_graphs, 8), 8)
    graph_ids = jnp.arange(b_pad, dtype=jnp.int32)
    one_hot_b = (graph_ids[:, None] == batch_p[None, :]).astype(jnp.float32)
    counts = one_hot_b.sum(axis=1)                       # nodes per graph
    pool = one_hot_b / jnp.maximum(counts, 1.0)[:, None]

    # ---- cost hint for the XLA scheduler -----------------------------------
    flops = 2 * num_layers * (n_pad * c_in * c_out + n_pad * n_pad * c_out) \
        + 2 * b_pad * n_pad * c_out
    bytes_accessed = (2 * adj.size
                      + 4 * (x_p.size + weights.size + biases.size
                             + pool.size + b_pad * c_out))
    cost = pl.CostEstimate(flops=flops, transcendentals=0,
                           bytes_accessed=bytes_accessed)

    # ---- scoped VMEM limit: resident buffers + in-kernel temporaries -------
    vmem_bytes = (2 * n_pad * n_pad                       # A in bf16
                  + 4 * n_pad * n_pad                     # in-kernel f32 cast
                  + 3 * 4 * n_pad * max(c_in, c_out)      # h working copies
                  + 4 * (weights.size + biases.size + x_p.size)
                  + 4 * (pool.size + b_pad * c_out))
    vmem_limit = min(max(2 * int(vmem_bytes) + (2 << 20), 32 << 20), 64 << 20)

    kernel = functools.partial(_gcn_net_kernel, num_layers=num_layers)
    vmem_spec = pl.BlockSpec(memory_space=pltpu.MemorySpace.VMEM)
    out = pl.pallas_call(
        kernel,
        out_shape=jax.ShapeDtypeStruct((b_pad, c_out), jnp.float32),
        in_specs=[vmem_spec] * 5,
        out_specs=vmem_spec,
        cost_estimate=cost,
        compiler_params=pltpu.CompilerParams(vmem_limit_bytes=vmem_limit),
    )(adj, x_p, weights, biases, pool)
    return out[:num_graphs]


def make_params(key, in_dim, hidden_dims):
    """Glorot-uniform weights, zero biases (matching PyG GCNConv defaults)."""
    assert all(h == in_dim for h in hidden_dims), "stacked weights assume equal dims"
    num_layers = len(hidden_dims)
    keys = jax.random.split(key, num_layers)
    scale = jnp.sqrt(6.0 / (in_dim + hidden_dims[0]))
    weights = jnp.stack(
        [jax.random.uniform(keys[l], (in_dim, hidden_dims[l]), jnp.float32,
                            -scale, scale)
         for l in range(num_layers)]
    )
    biases = jnp.zeros((num_layers, hidden_dims[0]), jnp.float32)
    return weights, biases


def _reference_forward(x, edge_index, batch, weights, biases, num_graphs):
    """Pure-JAX dense f32 reference (no padding) for correctness checking."""
    n = x.shape[0]
    adj = jnp.zeros((n, n), jnp.float32).at[edge_index[1], edge_index[0]].add(1.0)
    h = x
    for l in range(weights.shape[0]):
        h = jnp.maximum(adj @ (h @ weights[l]) + biases[l][None, :], 0.0)
    counts = jnp.zeros((num_graphs,), jnp.float32).at[batch].add(1.0)
    one_hot = (jnp.arange(num_graphs)[:, None] == batch[None, :]).astype(jnp.float32)
    pool = one_hot / jnp.maximum(counts[:, None], 1.0)
    return pool @ h


if __name__ == "__main__":
    key = jax.random.PRNGKey(0)
    k_x, k_e, k_w = jax.random.split(key, 3)

    # Small, module-consistent shapes: feature dim 128 (module default),
    # 64 nodes split over 2 graphs, 256 random directed edges.
    N, B, E = 64, 2, 256
    IN_DIM = 128
    HIDDEN_DIMS = [128, 128, 128, 128]

    x = jax.random.normal(k_x, (N, IN_DIM), jnp.float32)
    edge_index = jax.random.randint(k_e, (2, E), 0, N, jnp.int32)
    batch = (jnp.arange(N, dtype=jnp.int32) // (N // B)).astype(jnp.int32)

    weights, biases = make_params(k_w, IN_DIM, HIDDEN_DIMS)

    hg = gcn_net1_forward(x, edge_index, batch, weights, biases, num_graphs=B)
    hg = jax.block_until_ready(hg)

    assert hg.shape == (B, HIDDEN_DIMS[-1]), hg.shape
    assert bool(jnp.all(jnp.isfinite(hg)))

    ref = _reference_forward(x, edge_index, batch, weights, biases, B)
    assert bool(jnp.allclose(hg, ref, rtol=1e-4, atol=1e-3)), \
        float(jnp.max(jnp.abs(hg - ref)))

    print("KERNEL_OK")
</pallas_src>

<mosaic_0001>
module attributes {stable_mosaic.version = 11 : i64} {
  func.func @_gcn_net_kernel(%arg0: memref<128x128xbf16, #tpu.memory_space<vmem>>, %arg1: memref<128x128xf32, #tpu.memory_space<vmem>>, %arg2: memref<4x128x128xf32, #tpu.memory_space<vmem>>, %arg3: memref<4x128xf32, #tpu.memory_space<vmem>>, %arg4: memref<8x128xf32, #tpu.memory_space<vmem>>, %arg5: memref<8x128xf32, #tpu.memory_space<vmem>>) attributes {dimension_semantics = [], scalar_prefetch = 0 : i64, scratch_operands = 0 : i64, tpu.core_type = #tpu.core_type<tc>} {
    %c0 = arith.constant 0 : index
    %c0_0 = arith.constant 0 : index
    %0 = vector.load %arg0[%c0, %c0_0] : memref<128x128xbf16, #tpu.memory_space<vmem>>, vector<128x128xbf16>
    %1 = arith.extf %0 : vector<128x128xbf16> to vector<128x128xf32>
    %c0_1 = arith.constant 0 : index
    %c0_2 = arith.constant 0 : index
    %2 = vector.load %arg1[%c0_1, %c0_2] : memref<128x128xf32, #tpu.memory_space<vmem>>, vector<128x128xf32>
    %c0_3 = arith.constant 0 : index
    %c0_4 = arith.constant 0 : index
    %c0_5 = arith.constant 0 : index
    %3 = vector.load %arg2[%c0_3, %c0_4, %c0_5] : memref<4x128x128xf32, #tpu.memory_space<vmem>>, vector<1x128x128xf32>
    %4 = vector.shape_cast %3 : vector<1x128x128xf32> to vector<128x128xf32>
    %c0_6 = arith.constant 0 : index
    %c0_7 = arith.constant 0 : index
    %5 = vector.load %arg3[%c0_6, %c0_7] : memref<4x128xf32, #tpu.memory_space<vmem>>, vector<1x128xf32>
    %cst = arith.constant dense<0.000000e+00> : vector<128x128xf32>
    %6 = tpu.matmul %2, %4, %cst {dimension_numbers = #tpu.dot_dimension_numbers<[1], [0], [0], [1], [0, 0, 1, 1], [], []>} : vector<128x128xf32>, vector<128x128xf32>, vector<128x128xf32> -> vector<128x128xf32>
    %cst_8 = arith.constant dense<0.000000e+00> : vector<128x128xf32>
    %7 = tpu.matmul %1, %6, %cst_8 {dimension_numbers = #tpu.dot_dimension_numbers<[1], [0], [0], [1], [0, 0, 1, 1], [], []>} : vector<128x128xf32>, vector<128x128xf32>, vector<128x128xf32> -> vector<128x128xf32>
    %8 = vector.broadcast %5 : vector<1x128xf32> to vector<128x128xf32>
    %9 = arith.addf %7, %8 : vector<128x128xf32>
    %cst_9 = arith.constant 0.000000e+00 : f32
    %10 = vector.broadcast %cst_9 : f32 to vector<128x128xf32>
    %11 = arith.maximumf %9, %10 : vector<128x128xf32>
    %c1 = arith.constant 1 : index
    %c0_10 = arith.constant 0 : index
    %c0_11 = arith.constant 0 : index
    %12 = vector.load %arg2[%c1, %c0_10, %c0_11] : memref<4x128x128xf32, #tpu.memory_space<vmem>>, vector<1x128x128xf32>
    %13 = vector.shape_cast %12 : vector<1x128x128xf32> to vector<128x128xf32>
    %c1_12 = arith.constant 1 : index
    %c0_13 = arith.constant 0 : index
    %14 = vector.load %arg3[%c1_12, %c0_13] : memref<4x128xf32, #tpu.memory_space<vmem>>, vector<1x128xf32>
    %cst_14 = arith.constant dense<0.000000e+00> : vector<128x128xf32>
    %15 = tpu.matmul %11, %13, %cst_14 {dimension_numbers = #tpu.dot_dimension_numbers<[1], [0], [0], [1], [0, 0, 1, 1], [], []>} : vector<128x128xf32>, vector<128x128xf32>, vector<128x128xf32> -> vector<128x128xf32>
    %cst_15 = arith.constant dense<0.000000e+00> : vector<128x128xf32>
    %16 = tpu.matmul %1, %15, %cst_15 {dimension_numbers = #tpu.dot_dimension_numbers<[1], [0], [0], [1], [0, 0, 1, 1], [], []>} : vector<128x128xf32>, vector<128x128xf32>, vector<128x128xf32> -> vector<128x128xf32>
    %17 = vector.broadcast %14 : vector<1x128xf32> to vector<128x128xf32>
    %18 = arith.addf %16, %17 : vector<128x128xf32>
    %cst_16 = arith.constant 0.000000e+00 : f32
    %19 = vector.broadcast %cst_16 : f32 to vector<128x128xf32>
    %20 = arith.maximumf %18, %19 : vector<128x128xf32>
    %c2 = arith.constant 2 : index
    %c0_17 = arith.constant 0 : index
    %c0_18 = arith.constant 0 : index
    %21 = vector.load %arg2[%c2, %c0_17, %c0_18] : memref<4x128x128xf32, #tpu.memory_space<vmem>>, vector<1x128x128xf32>
    %22 = vector.shape_cast %21 : vector<1x128x128xf32> to vector<128x128xf32>
    %c2_19 = arith.constant 2 : index
    %c0_20 = arith.constant 0 : index
    %23 = vector.load %arg3[%c2_19, %c0_20] : memref<4x128xf32, #tpu.memory_space<vmem>>, vector<1x128xf32>
    %cst_21 = arith.constant dense<0.000000e+00> : vector<128x128xf32>
    %24 = tpu.matmul %20, %22, %cst_21 {dimension_numbers = #tpu.dot_dimension_numbers<[1], [0], [0], [1], [0, 0, 1, 1], [], []>} : vector<128x128xf32>, vector<128x128xf32>, vector<128x128xf32> -> vector<128x128xf32>
    %cst_22 = arith.constant dense<0.000000e+00> : vector<128x128xf32>
    %25 = tpu.matmul %1, %24, %cst_22 {dimension_numbers = #tpu.dot_dimension_numbers<[1], [0], [0], [1], [0, 0, 1, 1], [], []>} : vector<128x128xf32>, vector<128x128xf32>, vector<128x128xf32> -> vector<128x128xf32>
    %26 = vector.broadcast %23 : vector<1x128xf32> to vector<128x128xf32>
    %27 = arith.addf %25, %26 : vector<128x128xf32>
    %cst_23 = arith.constant 0.000000e+00 : f32
    %28 = vector.broadcast %cst_23 : f32 to vector<128x128xf32>
    %29 = arith.maximumf %27, %28 : vector<128x128xf32>
    %c3 = arith.constant 3 : index
    %c0_24 = arith.constant 0 : index
    %c0_25 = arith.constant 0 : index
    %30 = vector.load %arg2[%c3, %c0_24, %c0_25] : memref<4x128x128xf32, #tpu.memory_space<vmem>>, vector<1x128x128xf32>
    %31 = vector.shape_cast %30 : vector<1x128x128xf32> to vector<128x128xf32>
    %c3_26 = arith.constant 3 : index
    %c0_27 = arith.constant 0 : index
    %32 = vector.load %arg3[%c3_26, %c0_27] : memref<4x128xf32, #tpu.memory_space<vmem>>, vector<1x128xf32>
    %cst_28 = arith.constant dense<0.000000e+00> : vector<128x128xf32>
    %33 = tpu.matmul %29, %31, %cst_28 {dimension_numbers = #tpu.dot_dimension_numbers<[1], [0], [0], [1], [0, 0, 1, 1], [], []>} : vector<128x128xf32>, vector<128x128xf32>, vector<128x128xf32> -> vector<128x128xf32>
    %cst_29 = arith.constant dense<0.000000e+00> : vector<128x128xf32>
    %34 = tpu.matmul %1, %33, %cst_29 {dimension_numbers = #tpu.dot_dimension_numbers<[1], [0], [0], [1], [0, 0, 1, 1], [], []>} : vector<128x128xf32>, vector<128x128xf32>, vector<128x128xf32> -> vector<128x128xf32>
    %35 = vector.broadcast %32 : vector<1x128xf32> to vector<128x128xf32>
    %36 = arith.addf %34, %35 : vector<128x128xf32>
    %cst_30 = arith.constant 0.000000e+00 : f32
    %37 = vector.broadcast %cst_30 : f32 to vector<128x128xf32>
    %38 = arith.maximumf %36, %37 : vector<128x128xf32>
    %c0_31 = arith.constant 0 : index
    %c0_32 = arith.constant 0 : index
    %39 = vector.load %arg4[%c0_31, %c0_32] : memref<8x128xf32, #tpu.memory_space<vmem>>, vector<8x128xf32>
    %cst_33 = arith.constant dense<0.000000e+00> : vector<8x128xf32>
    %40 = tpu.matmul %39, %38, %cst_33 {dimension_numbers = #tpu.dot_dimension_numbers<[1], [0], [0], [1], [0, 0, 1, 1], [], []>} : vector<8x128xf32>, vector<128x128xf32>, vector<8x128xf32> -> vector<8x128xf32>
    %c0_34 = arith.constant 0 : index
    %c0_35 = arith.constant 0 : index
    %41 = vector.load %arg5[%c0_34, %c0_35] : memref<8x128xf32, #tpu.memory_space<vmem>>, vector<8x128xf32>
    tpu.vector_store %arg5[%c0_34, %c0_35], %40 {strides = array<i32>} : memref<8x128xf32, #tpu.memory_space<vmem>>, vector<8x128xf32>,
    return
  }
}

</mosaic_0001>

<llo_original>
// kernel: gcn_net1_forward.1
$region0: #{gcn_net1_forward.1}
  #allocation0 [shape = 'u32[]', space=smem, size = 0x4, offset = 0x4, fixed_abs, tag = 'smem constant byte address 0x4 - core index']
  #allocation1 [shape = 'u32[144,128]{1,0:T(1,128)}', space=vmem, size = 0x12000, scoped, tag = 'internal scratch']
  %s0 = inlined_call_operand.vmem [shape: bf16[128,128], index: 0, kind: input, shape index: {}]
  %s1 = inlined_call_operand.vmem [shape: f32[128,128], index: 1, kind: input, shape index: {}]
  %s2 = inlined_call_operand.hbm [shape: f32[4,128,128], index: 2, kind: input, shape index: {}]
  %s3 = inlined_call_operand.vmem [shape: f32[4,128], index: 3, kind: input, shape index: {}]
  %s4 = inlined_call_operand.vmem [shape: f32[8,128], index: 4, kind: input, shape index: {}]
  %s5 = inlined_call_operand.vmem [shape: f32[8,128], index: 5, kind: output, shape index: {}]
  %s6 = sld [smem:[#allocation0]]
  $region34: #{gcn_net1_forward.1} parent=0
    _
  %s8 = ssub.s32 1, %s6
  %s9 = scalar_select 0, %s8, %s6
  $region1: #{gcn_net1_forward.1} parent=0
    #allocation2 [shape = 'u8[262144]{0}', space=vmem, size = 0x40000, scoped, tag = 'input window, operand 2, single buffered']
    #allocation3 [shape = 's32[1]{0}', space=sflag, size = 0x4, scoped, tag = 'scoped memory for gcn_net1_forward.1']
    %10 = vsyncpa [#allocation3], 0
    // Predicated region
    $region2: #{gcn_net1_forward.1} parent=1 // pred_check
      _
    $region3: #{gcn_net1_forward.1} parent=1 // pred_check_branch
      %12 = sbr.rel (0) target = $region5
    $region4: #{gcn_net1_forward.1} parent=1 // pred_region
      _
    $region5: #{gcn_net1_forward.1} parent=1 // pred_fallthru
      _
    // Predicated region
    $region6: #{gcn_net1_forward.1} parent=1 // pred_check
      _
    $region7: #{gcn_net1_forward.1} parent=1 // pred_check_branch
      %14 = sbr.rel (0) target = $region9
    $region8: #{gcn_net1_forward.1} parent=1 // pred_region
      _
    $region9: #{gcn_net1_forward.1} parent=1 // pred_fallthru
      _
    // Predicated region
    $region10: #{gcn_net1_forward.1} parent=1 // pred_check
      _
    $region11: #{gcn_net1_forward.1} parent=1 // pred_check_branch
      %16 = sbr.rel (0) target = $region13
    $region12: #{gcn_net1_forward.1} parent=1 // pred_region
      %s18 = ssub.s32 8192, 8192
      %19 = vsyncadd [#allocation3], %s18
      %s20 = sshll.u32 [#allocation2], 4
      %s21 = int_to_ptr.vmem [resolvable:$true] %s20
      %26 = dma.hbm_to_vmem [thread:$0]  %s2, 8192, %s21, [#allocation3], 128, 128, 8
    $region13: #{gcn_net1_forward.1} parent=1 // pred_fallthru
      _
    // Predicated region
    $region14: #{gcn_net1_forward.1} parent=1 // pred_check
      _
    $region15: #{gcn_net1_forward.1} parent=1 // pred_check_branch
      %28 = sbr.rel (0) target = $region17
    $region16: #{gcn_net1_forward.1} parent=1 // pred_region
      _
    $region17: #{gcn_net1_forward.1} parent=1 // pred_fallthru
      _
    // Predicated region
    $region18: #{gcn_net1_forward.1} parent=1 // pred_check
      _
    $region19: #{gcn_net1_forward.1} parent=1 // pred_check_branch
      %30 = sbr.rel (0) target = $region21
    $region20: #{gcn_net1_forward.1} parent=1 // pred_region
      _
    $region21: #{gcn_net1_forward.1} parent=1 // pred_fallthru
      _
    // Predicated region
    $region22: #{gcn_net1_forward.1} parent=1 // pred_check
      _
    $region23: #{gcn_net1_forward.1} parent=1 // pred_check_branch
      %32 = sbr.rel (0) target = $region25
    $region24: #{gcn_net1_forward.1} parent=1 // pred_region
      %33 = dma.done [#allocation3], 8192
    $region25: #{gcn_net1_forward.1} parent=1 // pred_fallthru
      _
    %v34 = vld [vmem:[%s0] sm:$0xf]
    %v35 = vld [vmem:[%s0 + $0x4] sm:$0xf]
    %v36 = vld [vmem:[%s0 + $0x8] sm:$0xf]
    %v37 = vld [vmem:[%s0 + $0xc] sm:$0xf]
    %v38 = vld [vmem:[%s0 + $0x10] sm:$0xf]
    %v39 = vld [vmem:[%s0 + $0x14] sm:$0xf]
    %v40 = vld [vmem:[%s0 + $0x18] sm:$0xf]
    %v41 = vld [vmem:[%s0 + $0x1c] sm:$0xf]
    %v42 = vld [vmem:[%s0 + $0x20] sm:$0xf]
    %v43 = vld [vmem:[%s0 + $0x24] sm:$0xf]
    %v44 = vld [vmem:[%s0 + $0x28] sm:$0xf]
    %v45 = vld [vmem:[%s0 + $0x2c] sm:$0xf]
    %v46 = vld [vmem:[%s0 + $0x30] sm:$0xf]
    %v47 = vld [vmem:[%s0 + $0x34] sm:$0xf]
    %v48 = vld [vmem:[%s0 + $0x38] sm:$0xf]
    %v49 = vld [vmem:[%s0 + $0x3c] sm:$0xf]
    %v50 = vunpack.c.l.bf16 %v34
    %v51 = vunpack.c.l.bf16 %v35
    %v52 = vunpack.c.l.bf16 %v36
    %v53 = vunpack.c.l.bf16 %v37
    %v54 = vunpack.c.l.bf16 %v38
    %v55 = vunpack.c.l.bf16 %v39
    %v56 = vunpack.c.l.bf16 %v40
    %v57 = vunpack.c.l.bf16 %v41
    %v58 = vunpack.c.l.bf16 %v42
    %v59 = vunpack.c.l.bf16 %v43
    %v60 = vunpack.c.l.bf16 %v44
    %v61 = vunpack.c.l.bf16 %v45
    %v62 = vunpack.c.l.bf16 %v46
    %v63 = vunpack.c.l.bf16 %v47
    %v64 = vunpack.c.l.bf16 %v48
    %v65 = vunpack.c.l.bf16 %v49
    %v66 = vld [vmem:[%s1] sm:$0xff]
    %v67 = vld [vmem:[%s1 + $0x8] sm:$0xff]
    %v68 = vld [vmem:[%s1 + $0x10] sm:$0xff]
    %v69 = vld [vmem:[%s1 + $0x18] sm:$0xff]
    %v70 = vld [vmem:[%s1 + $0x20] sm:$0xff]
    %v71 = vld [vmem:[%s1 + $0x28] sm:$0xff]
    %v72 = vld [vmem:[%s1 + $0x30] sm:$0xff]
    %v73 = vld [vmem:[%s1 + $0x38] sm:$0xff]
    %v74 = vld [vmem:[%s1 + $0x40] sm:$0xff]
    %v75 = vld [vmem:[%s1 + $0x48] sm:$0xff]
    %v76 = vld [vmem:[%s1 + $0x50] sm:$0xff]
    %v77 = vld [vmem:[%s1 + $0x58] sm:$0xff]
    %v78 = vld [vmem:[%s1 + $0x60] sm:$0xff]
    %v79 = vld [vmem:[%s1 + $0x68] sm:$0xff]
    %v80 = vld [vmem:[%s1 + $0x70] sm:$0xff]
    %v81 = vld [vmem:[%s1 + $0x78] sm:$0xff]
    %v82 = vld [vmem:[#allocation2] sm:$0xff]
    %v83 = vld [vmem:[#allocation2 + $0x8] sm:$0xff]
    %v84 = vld [vmem:[#allocation2 + $0x10] sm:$0xff]
    %v85 = vld [vmem:[#allocation2 + $0x18] sm:$0xff]
    %v86 = vld [vmem:[#allocation2 + $0x20] sm:$0xff]
    %v87 = vld [vmem:[#allocation2 + $0x28] sm:$0xff]
    %v88 = vld [vmem:[#allocation2 + $0x30] sm:$0xff]
    %v89 = vld [vmem:[#allocation2 + $0x38] sm:$0xff]
    %v90 = vld [vmem:[#allocation2 + $0x40] sm:$0xff]
    %v91 = vld [vmem:[#allocation2 + $0x48] sm:$0xff]
    %v92 = vld [vmem:[#allocation2 + $0x50] sm:$0xff]
    %v93 = vld [vmem:[#allocation2 + $0x58] sm:$0xff]
    %v94 = vld [vmem:[#allocation2 + $0x60] sm:$0xff]
    %v95 = vld [vmem:[#allocation2 + $0x68] sm:$0xff]
    %v96 = vld [vmem:[#allocation2 + $0x70] sm:$0xff]
    %v97 = vld [vmem:[#allocation2 + $0x78] sm:$0xff]
    %v98 = vld [vmem:[%s3] sm:$0x1]
    %99 = vmatprep.subr.mxu0 0.0
    %100 = vmatpush1.msra.mxu0 %v97
    %101 = vmatprep.subr.mxu0 0.0
    %102 = vmatpush1.msra.mxu0 %v96
    %103 = vmatprep.subr.mxu0 0.0
    %104 = vmatpush1.msra.mxu0 %v95
    %105 = vmatprep.subr.mxu0 0.0
    %106 = vmatpush1.msra.mxu0 %v94
    %107 = vmatprep.subr.mxu0 0.0
    %108 = vmatpush1.msra.mxu0 %v93
    %109 = vmatprep.subr.mxu0 0.0
    %110 = vmatpush1.msra.mxu0 %v92
    %111 = vmatprep.subr.mxu0 0.0
    %112 = vmatpush1.msra.mxu0 %v91
    %113 = vmatprep.subr.mxu0 0.0
    %114 = vmatpush1.msra.mxu0 %v90
    %115 = vmatprep.subr.mxu0 0.0
    %116 = vmatpush1.msra.mxu0 %v89
    %117 = vmatprep.subr.mxu0 0.0
    %118 = vmatpush1.msra.mxu0 %v88
    %119 = vmatprep.subr.mxu0 0.0
    %120 = vmatpush1.msra.mxu0 %v87
    %121 = vmatprep.subr.mxu0 0.0
    %122 = vmatpush1.msra.mxu0 %v86
    %123 = vmatprep.subr.mxu0 0.0
    %124 = vmatpush1.msra.mxu0 %v85
    %125 = vmatprep.subr.mxu0 0.0
    %126 = vmatpush1.msra.mxu0 %v84
    %127 = vmatprep.subr.mxu0 0.0
    %128 = vmatpush1.msra.mxu0 %v83
    %129 = vmatprep.subr.mxu0 0.0
    %130 = vmatpush1.msra.mxu0 %v82
    %131 = vmatprep.subr.mxu0 0.0
    %132 = vmatpush2.msra.mxu0 0.0
    %133 = vmatprep.subr.mxu0 0.0
    %134 = vmatpush2.msra.mxu0 0.0
    %135 = vmatprep.subr.mxu0 0.0
    %136 = vmatpush2.msra.mxu0 0.0
    %137 = vmatprep.subr.mxu0 0.0
    %138 = vmatpush2.msra.mxu0 0.0
    %139 = vmatprep.subr.mxu0 0.0
    %140 = vmatpush2.msra.mxu0 0.0
    %141 = vmatprep.subr.mxu0 0.0
    %142 = vmatpush2.msra.mxu0 0.0
    %143 = vmatprep.subr.mxu0 0.0
    %144 = vmatpush2.msra.mxu0 0.0
    %145 = vmatprep.subr.mxu0 0.0
    %146 = vmatpush2.msra.mxu0 0.0
    %147 = vmatprep.subr.mxu0 0.0
    %148 = vmatpush2.msra.mxu0 0.0
    %149 = vmatprep.subr.mxu0 0.0
    %150 = vmatpush2.msra.mxu0 0.0
    %151 = vmatprep.subr.mxu0 0.0
    %152 = vmatpush2.msra.mxu0 0.0
    %153 = vmatprep.subr.mxu0 0.0
    %154 = vmatpush2.msra.mxu0 0.0
    %155 = vmatprep.subr.mxu0 0.0
    %156 = vmatpush2.msra.mxu0 0.0
    %157 = vmatprep.subr.mxu0 0.0
    %158 = vmatpush2.msra.mxu0 0.0
    %159 = vmatprep.subr.mxu0 0.0
    %160 = vmatpush2.msra.mxu0 0.0
    %161 = vmatprep.subr.mxu0 0.0
    %162 = vmatpush2.msra.mxu0 0.0
    %163 = vmatprep.mubr.f32.mxu0 0.0
    %164 = vmatmul.mubr.f32.gmra.mxu0 %v66
    %v165 = vpop.f32.mrf.mxu0
    %v166 = vadd.f32 0.0, %v165
    %v167 = vpop.f32.mrf.mxu0
    %168 = vmatprep.mubr.f32.mxu0 0.0
    %169 = vmatmul.mubr.f32.gmra.mxu0 %v67
    %v170 = vpop.f32.mrf.mxu0
    %v171 = vadd.f32 0.0, %v170
    %v172 = vpop.f32.mrf.mxu0
    %173 = vmatprep.mubr.f32.mxu0 0.0
    %174 = vmatmul.mubr.f32.gmra.mxu0 %v68
    %v175 = vpop.f32.mrf.mxu0
    %v176 = vadd.f32 0.0, %v175
    %v177 = vpop.f32.mrf.mxu0
    %178 = vmatprep.mubr.f32.mxu0 0.0
    %179 = vmatmul.mubr.f32.gmra.mxu0 %v69
    %v180 = vpop.f32.mrf.mxu0
    %v181 = vadd.f32 0.0, %v180
    %v182 = vpop.f32.mrf.mxu0
    %183 = vmatprep.mubr.f32.mxu0 0.0
    %184 = vmatmul.mubr.f32.gmra.mxu0 %v70
    %v185 = vpop.f32.mrf.mxu0
    %v186 = vadd.f32 0.0, %v185
    %v187 = vpop.f32.mrf.mxu0
    %188 = vmatprep.mubr.f32.mxu0 0.0
    %189 = vmatmul.mubr.f32.gmra.mxu0 %v71
    %v190 = vpop.f32.mrf.mxu0
    %v191 = vadd.f32 0.0, %v190
    %v192 = vpop.f32.mrf.mxu0
    %193 = vmatprep.mubr.f32.mxu0 0.0
    %194 = vmatmul.mubr.f32.gmra.mxu0 %v72
    %v195 = vpop.f32.mrf.mxu0
    %v196 = vadd.f32 0.0, %v195
    %v197 = vpop.f32.mrf.mxu0
    %198 = vmatprep.mubr.f32.mxu0 0.0
    %199 = vmatmul.mubr.f32.gmra.mxu0 %v73
    %v200 = vpop.f32.mrf.mxu0
    %v201 = vadd.f32 0.0, %v200
    %v202 = vpop.f32.mrf.mxu0
    %203 = vmatprep.mubr.f32.mxu0 0.0
    %204 = vmatmul.mubr.f32.gmra.mxu0 %v74
    %v205 = vpop.f32.mrf.mxu0
    %v206 = vadd.f32 0.0, %v205
    %v207 = vpop.f32.mrf.mxu0
    %208 = vmatprep.mubr.f32.mxu0 0.0
    %209 = vmatmul.mubr.f32.gmra.mxu0 %v75
    %v210 = vpop.f32.mrf.mxu0
    %v211 = vadd.f32 0.0, %v210
    %v212 = vpop.f32.mrf.mxu0
    %213 = vmatprep.mubr.f32.mxu0 0.0
    %214 = vmatmul.mubr.f32.gmra.mxu0 %v76
    %v215 = vpop.f32.mrf.mxu0
    %v216 = vadd.f32 0.0, %v215
    %v217 = vpop.f32.mrf.mxu0
    %218 = vmatprep.mubr.f32.mxu0 0.0
    %219 = vmatmul.mubr.f32.gmra.mxu0 %v77
    %v220 = vpop.f32.mrf.mxu0
    %v221 = vadd.f32 0.0, %v220
    %v222 = vpop.f32.mrf.mxu0
    %223 = vmatprep.mubr.f32.mxu0 0.0
    %224 = vmatmul.mubr.f32.gmra.mxu0 %v78
    %v225 = vpop.f32.mrf.mxu0
    %v226 = vadd.f32 0.0, %v225
    %v227 = vpop.f32.mrf.mxu0
    %228 = vmatprep.mubr.f32.mxu0 0.0
    %229 = vmatmul.mubr.f32.gmra.mxu0 %v79
    %v230 = vpop.f32.mrf.mxu0
    %v231 = vadd.f32 0.0, %v230
    %v232 = vpop.f32.mrf.mxu0
    %233 = vmatprep.mubr.f32.mxu0 0.0
    %234 = vmatmul.mubr.f32.gmra.mxu0 %v80
    %v235 = vpop.f32.mrf.mxu0
    %v236 = vadd.f32 0.0, %v235
    %v237 = vpop.f32.mrf.mxu0
    %238 = vmatprep.mubr.f32.mxu0 0.0
    %239 = vmatmul.mubr.f32.gmra.mxu0 %v81
    %v240 = vpop.f32.mrf.mxu0
    %v241 = vadd.f32 0.0, %v240
    %v242 = vpop.f32.mrf.mxu0
    %243 = vdwg.mxu0
    %v244 = vlaneseq
    %v245 = vshrl.u32 %v244, 7
    %v246 = vsub.s32 0, %v245
    %v247 = vrot.slane %v98, %v246
    %248 = vmatprep.subr.mxu0 0.0
    %249 = vmatpush1.msra.mxu0 %v241
    %250 = vmatprep.subr.mxu0 0.0
    %251 = vmatpush1.msra.mxu0 %v236
    %252 = vmatprep.subr.mxu0 0.0
    %253 = vmatpush1.msra.mxu0 %v231
    %254 = vmatprep.subr.mxu0 0.0
    %255 = vmatpush1.msra.mxu0 %v226
    %256 = vmatprep.subr.mxu0 0.0
    %257 = vmatpush1.msra.mxu0 %v221
    %258 = vmatprep.subr.mxu0 0.0
    %259 = vmatpush1.msra.mxu0 %v216
    %260 = vmatprep.subr.mxu0 0.0
    %261 = vmatpush1.msra.mxu0 %v211
    %262 = vmatprep.subr.mxu0 0.0
    %263 = vmatpush1.msra.mxu0 %v206
    %264 = vmatprep.subr.mxu0 0.0
    %265 = vmatpush1.msra.mxu0 %v201
    %266 = vmatprep.subr.mxu0 0.0
    %267 = vmatpush1.msra.mxu0 %v196
    %268 = vmatprep.subr.mxu0 0.0
    %269 = vmatpush1.msra.mxu0 %v191
    %270 = vmatprep.subr.mxu0 0.0
    %271 = vmatpush1.msra.mxu0 %v186
    %272 = vmatprep.subr.mxu0 0.0
    %273 = vmatpush1.msra.mxu0 %v181
    %274 = vmatprep.subr.mxu0 0.0
    %275 = vmatpush1.msra.mxu0 %v176
    %276 = vmatprep.subr.mxu0 0.0
    %277 = vmatpush1.msra.mxu0 %v171
    %278 = vmatprep.subr.mxu0 0.0
    %279 = vmatpush1.msra.mxu0 %v166
    %280 = vmatprep.subr.mxu0 0.0
    %281 = vmatpush2.msra.mxu0 0.0
    %282 = vmatprep.subr.mxu0 0.0
    %283 = vmatpush2.msra.mxu0 0.0
    %284 = vmatprep.subr.mxu0 0.0
    %285 = vmatpush2.msra.mxu0 0.0
    %286 = vmatprep.subr.mxu0 0.0
    %287 = vmatpush2.msra.mxu0 0.0
    %288 = vmatprep.subr.mxu0 0.0
    %289 = vmatpush2.msra.mxu0 0.0
    %290 = vmatprep.subr.mxu0 0.0
    %291 = vmatpush2.msra.mxu0 0.0
    %292 = vmatprep.subr.mxu0 0.0
    %293 = vmatpush2.msra.mxu0 0.0
    %294 = vmatprep.subr.mxu0 0.0
    %295 = vmatpush2.msra.mxu0 0.0
    %296 = vmatprep.subr.mxu0 0.0
    %297 = vmatpush2.msra.mxu0 0.0
    %298 = vmatprep.subr.mxu0 0.0
    %299 = vmatpush2.msra.mxu0 0.0
    %300 = vmatprep.subr.mxu0 0.0
    %301 = vmatpush2.msra.mxu0 0.0
    %302 = vmatprep.subr.mxu0 0.0
    %303 = vmatpush2.msra.mxu0 0.0
    %304 = vmatprep.subr.mxu0 0.0
    %305 = vmatpush2.msra.mxu0 0.0
    %306 = vmatprep.subr.mxu0 0.0
    %307 = vmatpush2.msra.mxu0 0.0
    %308 = vmatprep.subr.mxu0 0.0
    %309 = vmatpush2.msra.mxu0 0.0
    %310 = vmatprep.subr.mxu0 0.0
    %311 = vmatpush2.msra.mxu0 0.0
    %312 = vmatprep.mubr.f32.mxu0 0.0
    %313 = vmatmul.mubr.f32.gmra.mxu0 %v50
    %v314 = vpop.f32.mrf.mxu0
    %v315 = vadd.f32 %v247, %v314
    %v316 = vpop.f32.mrf.mxu0
    %317 = vmatprep.mubr.f32.mxu0 0.0
    %318 = vmatmul.mubr.f32.gmra.mxu0 %v51
    %v319 = vpop.f32.mrf.mxu0
    %v320 = vadd.f32 %v247, %v319
    %v321 = vpop.f32.mrf.mxu0
    %322 = vmatprep.mubr.f32.mxu0 0.0
    %323 = vmatmul.mubr.f32.gmra.mxu0 %v52
    %v324 = vpop.f32.mrf.mxu0
    %v325 = vadd.f32 %v247, %v324
    %v326 = vpop.f32.mrf.mxu0
    %327 = vmatprep.mubr.f32.mxu0 0.0
    %328 = vmatmul.mubr.f32.gmra.mxu0 %v53
    %v329 = vpop.f32.mrf.mxu0
    %v330 = vadd.f32 %v247, %v329
    %v331 = vpop.f32.mrf.mxu0
    %332 = vmatprep.mubr.f32.mxu0 0.0
    %333 = vmatmul.mubr.f32.gmra.mxu0 %v54
    %v334 = vpop.f32.mrf.mxu0
    %v335 = vadd.f32 %v247, %v334
    %v336 = vpop.f32.mrf.mxu0
    %337 = vmatprep.mubr.f32.mxu0 0.0
    %338 = vmatmul.mubr.f32.gmra.mxu0 %v55
    %v339 = vpop.f32.mrf.mxu0
    %v340 = vadd.f32 %v247, %v339
    %v341 = vpop.f32.mrf.mxu0
    %342 = vmatprep.mubr.f32.mxu0 0.0
    %343 = vmatmul.mubr.f32.gmra.mxu0 %v56
    %v344 = vpop.f32.mrf.mxu0
    %v345 = vadd.f32 %v247, %v344
    %v346 = vpop.f32.mrf.mxu0
    %347 = vmatprep.mubr.f32.mxu0 0.0
    %348 = vmatmul.mubr.f32.gmra.mxu0 %v57
    %v349 = vpop.f32.mrf.mxu0
    %v350 = vadd.f32 %v247, %v349
    %v351 = vpop.f32.mrf.mxu0
    %352 = vmatprep.mubr.f32.mxu0 0.0
    %353 = vmatmul.mubr.f32.gmra.mxu0 %v58
    %v354 = vpop.f32.mrf.mxu0
    %v355 = vadd.f32 %v247, %v354
    %v356 = vpop.f32.mrf.mxu0
    %357 = vmatprep.mubr.f32.mxu0 0.0
    %358 = vmatmul.mubr.f32.gmra.mxu0 %v59
    %v359 = vpop.f32.mrf.mxu0
    %v360 = vadd.f32 %v247, %v359
    %v361 = vpop.f32.mrf.mxu0
    %362 = vmatprep.mubr.f32.mxu0 0.0
    %363 = vmatmul.mubr.f32.gmra.mxu0 %v60
    %v364 = vpop.f32.mrf.mxu0
    %v365 = vadd.f32 %v247, %v364
    %v366 = vpop.f32.mrf.mxu0
    %367 = vmatprep.mubr.f32.mxu0 0.0
    %368 = vmatmul.mubr.f32.gmra.mxu0 %v61
    %v369 = vpop.f32.mrf.mxu0
    %v370 = vadd.f32 %v247, %v369
    %v371 = vpop.f32.mrf.mxu0
    %372 = vmatprep.mubr.f32.mxu0 0.0
    %373 = vmatmul.mubr.f32.gmra.mxu0 %v62
    %v374 = vpop.f32.mrf.mxu0
    %v375 = vadd.f32 %v247, %v374
    %v376 = vpop.f32.mrf.mxu0
    %377 = vmatprep.mubr.f32.mxu0 0.0
    %378 = vmatmul.mubr.f32.gmra.mxu0 %v63
    %v379 = vpop.f32.mrf.mxu0
    %v380 = vadd.f32 %v247, %v379
    %v381 = vpop.f32.mrf.mxu0
    %382 = vmatprep.mubr.f32.mxu0 0.0
    %383 = vmatmul.mubr.f32.gmra.mxu0 %v64
    %v384 = vpop.f32.mrf.mxu0
    %v385 = vadd.f32 %v247, %v384
    %v386 = vpop.f32.mrf.mxu0
    %387 = vmatprep.mubr.f32.mxu0 0.0
    %388 = vmatmul.mubr.f32.gmra.mxu0 %v65
    %v389 = vpop.f32.mrf.mxu0
    %v390 = vadd.f32 %v247, %v389
    %v391 = vpop.f32.mrf.mxu0
    %392 = vdwg.mxu0
    %v393 = vmax.f32 %v315, 0.0
    %v394 = vmax.f32 %v320, 0.0
    %v395 = vmax.f32 %v325, 0.0
    %v396 = vmax.f32 %v330, 0.0
    %v397 = vmax.f32 %v335, 0.0
    %v398 = vmax.f32 %v340, 0.0
    %v399 = vmax.f32 %v345, 0.0
    %v400 = vmax.f32 %v350, 0.0
    %v401 = vmax.f32 %v355, 0.0
    %v402 = vmax.f32 %v360, 0.0
    %v403 = vmax.f32 %v365, 0.0
    %v404 = vmax.f32 %v370, 0.0
    %v405 = vmax.f32 %v375, 0.0
    %v406 = vmax.f32 %v380, 0.0
    %v407 = vmax.f32 %v385, 0.0
    %v408 = vmax.f32 %v390, 0.0
    %s409 = scalar_lea.vmem [#allocation2], 128
    %v410 = vld [vmem:[%s409] sm:$0xff]
    %v411 = vld [vmem:[%s409 + $0x8] sm:$0xff]
    %v412 = vld [vmem:[%s409 + $0x10] sm:$0xff]
    %v413 = vld [vmem:[%s409 + $0x18] sm:$0xff]
    %v414 = vld [vmem:[%s409 + $0x20] sm:$0xff]
    %v415 = vld [vmem:[%s409 + $0x28] sm:$0xff]
    %v416 = vld [vmem:[%s409 + $0x30] sm:$0xff]
    %v417 = vld [vmem:[%s409 + $0x38] sm:$0xff]
    %v418 = vld [vmem:[%s409 + $0x40] sm:$0xff]
    %v419 = vld [vmem:[%s409 + $0x48] sm:$0xff]
    %v420 = vld [vmem:[%s409 + $0x50] sm:$0xff]
    %v421 = vld [vmem:[%s409 + $0x58] sm:$0xff]
    %v422 = vld [vmem:[%s409 + $0x60] sm:$0xff]
    %v423 = vld [vmem:[%s409 + $0x68] sm:$0xff]
    %v424 = vld [vmem:[%s409 + $0x70] sm:$0xff]
    %v425 = vld [vmem:[%s409 + $0x78] sm:$0xff]
    %v426 = vld [vmem:[%s3 + $0x1] sm:$0x1]
    %427 = vmatprep.subr.mxu0 0.0
    %428 = vmatpush1.msra.mxu0 %v425
    %429 = vmatprep.subr.mxu0 0.0
    %430 = vmatpush1.msra.mxu0 %v424
    %431 = vmatprep.subr.mxu0 0.0
    %432 = vmatpush1.msra.mxu0 %v423
    %433 = vmatprep.subr.mxu0 0.0
    %434 = vmatpush1.msra.mxu0 %v422
    %435 = vmatprep.subr.mxu0 0.0
    %436 = vmatpush1.msra.mxu0 %v421
    %437 = vmatprep.subr.mxu0 0.0
    %438 = vmatpush1.msra.mxu0 %v420
    %439 = vmatprep.subr.mxu0 0.0
    %440 = vmatpush1.msra.mxu0 %v419
    %441 = vmatprep.subr.mxu0 0.0
    %442 = vmatpush1.msra.mxu0 %v418
    %443 = vmatprep.subr.mxu0 0.0
    %444 = vmatpush1.msra.mxu0 %v417
    %445 = vmatprep.subr.mxu0 0.0
    %446 = vmatpush1.msra.mxu0 %v416
    %447 = vmatprep.subr.mxu0 0.0
    %448 = vmatpush1.msra.mxu0 %v415
    %449 = vmatprep.subr.mxu0 0.0
    %450 = vmatpush1.msra.mxu0 %v414
    %451 = vmatprep.subr.mxu0 0.0
    %452 = vmatpush1.msra.mxu0 %v413
    %453 = vmatprep.subr.mxu0 0.0
    %454 = vmatpush1.msra.mxu0 %v412
    %455 = vmatprep.subr.mxu0 0.0
    %456 = vmatpush1.msra.mxu0 %v411
    %457 = vmatprep.subr.mxu0 0.0
    %458 = vmatpush1.msra.mxu0 %v410
    %459 = vmatprep.subr.mxu0 0.0
    %460 = vmatpush2.msra.mxu0 0.0
    %461 = vmatprep.subr.mxu0 0.0
    %462 = vmatpush2.msra.mxu0 0.0
    %463 = vmatprep.subr.mxu0 0.0
    %464 = vmatpush2.msra.mxu0 0.0
    %465 = vmatprep.subr.mxu0 0.0
    %466 = vmatpush2.msra.mxu0 0.0
    %467 = vmatprep.subr.mxu0 0.0
    %468 = vmatpush2.msra.mxu0 0.0
    %469 = vmatprep.subr.mxu0 0.0
    %470 = vmatpush2.msra.mxu0 0.0
    %471 = vmatprep.subr.mxu0 0.0
    %472 = vmatpush2.msra.mxu0 0.0
    %473 = vmatprep.subr.mxu0 0.0
    %474 = vmatpush2.msra.mxu0 0.0
    %475 = vmatprep.subr.mxu0 0.0
    %476 = vmatpush2.msra.mxu0 0.0
    %477 = vmatprep.subr.mxu0 0.0
    %478 = vmatpush2.msra.mxu0 0.0
    %479 = vmatprep.subr.mxu0 0.0
    %480 = vmatpush2.msra.mxu0 0.0
    %481 = vmatprep.subr.mxu0 0.0
    %482 = vmatpush2.msra.mxu0 0.0
    %483 = vmatprep.subr.mxu0 0.0
    %484 = vmatpush2.msra.mxu0 0.0
    %485 = vmatprep.subr.mxu0 0.0
    %486 = vmatpush2.msra.mxu0 0.0
    %487 = vmatprep.subr.mxu0 0.0
    %488 = vmatpush2.msra.mxu0 0.0
    %489 = vmatprep.subr.mxu0 0.0
    %490 = vmatpush2.msra.mxu0 0.0
    %491 = vmatprep.mubr.f32.mxu0 0.0
    %492 = vmatmul.mubr.f32.gmra.mxu0 %v393
    %v493 = vpop.f32.mrf.mxu0
    %v494 = vadd.f32 0.0, %v493
    %v495 = vpop.f32.mrf.mxu0
    %496 = vmatprep.mubr.f32.mxu0 0.0
    %497 = vmatmul.mubr.f32.gmra.mxu0 %v394
    %v498 = vpop.f32.mrf.mxu0
    %v499 = vadd.f32 0.0, %v498
    %v500 = vpop.f32.mrf.mxu0
    %501 = vmatprep.mubr.f32.mxu0 0.0
    %502 = vmatmul.mubr.f32.gmra.mxu0 %v395
    %v503 = vpop.f32.mrf.mxu0
    %v504 = vadd.f32 0.0, %v503
    %v505 = vpop.f32.mrf.mxu0
    %506 = vmatprep.mubr.f32.mxu0 0.0
    %507 = vmatmul.mubr.f32.gmra.mxu0 %v396
    %v508 = vpop.f32.mrf.mxu0
    %v509 = vadd.f32 0.0, %v508
    %v510 = vpop.f32.mrf.mxu0
    %511 = vmatprep.mubr.f32.mxu0 0.0
    %512 = vmatmul.mubr.f32.gmra.mxu0 %v397
    %v513 = vpop.f32.mrf.mxu0
    %v514 = vadd.f32 0.0, %v513
    %v515 = vpop.f32.mrf.mxu0
    %516 = vmatprep.mubr.f32.mxu0 0.0
    %517 = vmatmul.mubr.f32.gmra.mxu0 %v398
    %v518 = vpop.f32.mrf.mxu0
    %v519 = vadd.f32 0.0, %v518
    %v520 = vpop.f32.mrf.mxu0
    %521 = vmatprep.mubr.f32.mxu0 0.0
    %522 = vmatmul.mubr.f32.gmra.mxu0 %v399
    %v523 = vpop.f32.mrf.mxu0
    %v524 = vadd.f32 0.0, %v523
    %v525 = vpop.f32.mrf.mxu0
    %526 = vmatprep.mubr.f32.mxu0 0.0
    %527 = vmatmul.mubr.f32.gmra.mxu0 %v400
    %v528 = vpop.f32.mrf.mxu0
    %v529 = vadd.f32 0.0, %v528
    %v530 = vpop.f32.mrf.mxu0
    %531 = vmatprep.mubr.f32.mxu0 0.0
    %532 = vmatmul.mubr.f32.gmra.mxu0 %v401
    %v533 = vpop.f32.mrf.mxu0
    %v534 = vadd.f32 0.0, %v533
    %v535 = vpop.f32.mrf.mxu0
    %536 = vmatprep.mubr.f32.mxu0 0.0
    %537 = vmatmul.mubr.f32.gmra.mxu0 %v402
    %v538 = vpop.f32.mrf.mxu0
    %v539 = vadd.f32 0.0, %v538
    %v540 = vpop.f32.mrf.mxu0
    %541 = vmatprep.mubr.f32.mxu0 0.0
    %542 = vmatmul.mubr.f32.gmra.mxu0 %v403
    %v543 = vpop.f32.mrf.mxu0
    %v544 = vadd.f32 0.0, %v543
    %v545 = vpop.f32.mrf.mxu0
    %546 = vmatprep.mubr.f32.mxu0 0.0
    %547 = vmatmul.mubr.f32.gmra.mxu0 %v404
    %v548 = vpop.f32.mrf.mxu0
    %v549 = vadd.f32 0.0, %v548
    %v550 = vpop.f32.mrf.mxu0
    %551 = vmatprep.mubr.f32.mxu0 0.0
    %552 = vmatmul.mubr.f32.gmra.mxu0 %v405
    %v553 = vpop.f32.mrf.mxu0
    %v554 = vadd.f32 0.0, %v553
    %v555 = vpop.f32.mrf.mxu0
    %556 = vmatprep.mubr.f32.mxu0 0.0
    %557 = vmatmul.mubr.f32.gmra.mxu0 %v406
    %v558 = vpop.f32.mrf.mxu0
    %v559 = vadd.f32 0.0, %v558
    %v560 = vpop.f32.mrf.mxu0
    %561 = vmatprep.mubr.f32.mxu0 0.0
    %562 = vmatmul.mubr.f32.gmra.mxu0 %v407
    %v563 = vpop.f32.mrf.mxu0
    %v564 = vadd.f32 0.0, %v563
    %v565 = vpop.f32.mrf.mxu0
    %566 = vmatprep.mubr.f32.mxu0 0.0
    %567 = vmatmul.mubr.f32.gmra.mxu0 %v408
    %v568 = vpop.f32.mrf.mxu0
    %v569 = vadd.f32 0.0, %v568
    %v570 = vpop.f32.mrf.mxu0
    %571 = vdwg.mxu0
    %v572 = vlaneseq
    %v573 = vshrl.u32 %v572, 7
    %v574 = vsub.s32 0, %v573
    %v575 = vrot.slane %v426, %v574
    %576 = vmatprep.subr.mxu0 0.0
    %577 = vmatpush1.msra.mxu0 %v569
    %578 = vmatprep.subr.mxu0 0.0
    %579 = vmatpush1.msra.mxu0 %v564
    %580 = vmatprep.subr.mxu0 0.0
    %581 = vmatpush1.msra.mxu0 %v559
    %582 = vmatprep.subr.mxu0 0.0
    %583 = vmatpush1.msra.mxu0 %v554
    %584 = vmatprep.subr.mxu0 0.0
    %585 = vmatpush1.msra.mxu0 %v549
    %586 = vmatprep.subr.mxu0 0.0
    %587 = vmatpush1.msra.mxu0 %v544
    %588 = vmatprep.subr.mxu0 0.0
    %589 = vmatpush1.msra.mxu0 %v539
    %590 = vmatprep.subr.mxu0 0.0
    %591 = vmatpush1.msra.mxu0 %v534
    %592 = vmatprep.subr.mxu0 0.0
    %593 = vmatpush1.msra.mxu0 %v529
    %594 = vmatprep.subr.mxu0 0.0
    %595 = vmatpush1.msra.mxu0 %v524
    %596 = vmatprep.subr.mxu0 0.0
    %597 = vmatpush1.msra.mxu0 %v519
    %598 = vmatprep.subr.mxu0 0.0
    %599 = vmatpush1.msra.mxu0 %v514
    %600 = vmatprep.subr.mxu0 0.0
    %601 = vmatpush1.msra.mxu0 %v509
    %602 = vmatprep.subr.mxu0 0.0
    %603 = vmatpush1.msra.mxu0 %v504
    %604 = vmatprep.subr.mxu0 0.0
    %605 = vmatpush1.msra.mxu0 %v499
    %606 = vmatprep.subr.mxu0 0.0
    %607 = vmatpush1.msra.mxu0 %v494
    %608 = vmatprep.subr.mxu0 0.0
    %609 = vmatpush2.msra.mxu0 0.0
    %610 = vmatprep.subr.mxu0 0.0
    %611 = vmatpush2.msra.mxu0 0.0
    %612 = vmatprep.subr.mxu0 0.0
    %613 = vmatpush2.msra.mxu0 0.0
    %614 = vmatprep.subr.mxu0 0.0
    %615 = vmatpush2.msra.mxu0 0.0
    %616 = vmatprep.subr.mxu0 0.0
    %617 = vmatpush2.msra.mxu0 0.0
    %618 = vmatprep.subr.mxu0 0.0
    %619 = vmatpush2.msra.mxu0 0.0
    %620 = vmatprep.subr.mxu0 0.0
    %621 = vmatpush2.msra.mxu0 0.0
    %622 = vmatprep.subr.mxu0 0.0
    %623 = vmatpush2.msra.mxu0 0.0
    %624 = vmatprep.subr.mxu0 0.0
    %625 = vmatpush2.msra.mxu0 0.0
    %626 = vmatprep.subr.mxu0 0.0
    %627 = vmatpush2.msra.mxu0 0.0
    %628 = vmatprep.subr.mxu0 0.0
    %629 = vmatpush2.msra.mxu0 0.0
    %630 = vmatprep.subr.mxu0 0.0
    %631 = vmatpush2.msra.mxu0 0.0
    %632 = vmatprep.subr.mxu0 0.0
    %633 = vmatpush2.msra.mxu0 0.0
    %634 = vmatprep.subr.mxu0 0.0
    %635 = vmatpush2.msra.mxu0 0.0
    %636 = vmatprep.subr.mxu0 0.0
    %637 = vmatpush2.msra.mxu0 0.0
    %638 = vmatprep.subr.mxu0 0.0
    %639 = vmatpush2.msra.mxu0 0.0
    %640 = vmatprep.mubr.f32.mxu0 0.0
    %641 = vmatmul.mubr.f32.gmra.mxu0 %v50
    %v642 = vpop.f32.mrf.mxu0
    %v643 = vadd.f32 %v575, %v642
    %v644 = vpop.f32.mrf.mxu0
    %645 = vmatprep.mubr.f32.mxu0 0.0
    %646 = vmatmul.mubr.f32.gmra.mxu0 %v51
    %v647 = vpop.f32.mrf.mxu0
    %v648 = vadd.f32 %v575, %v647
    %v649 = vpop.f32.mrf.mxu0
    %650 = vmatprep.mubr.f32.mxu0 0.0
    %651 = vmatmul.mubr.f32.gmra.mxu0 %v52
    %v652 = vpop.f32.mrf.mxu0
    %v653 = vadd.f32 %v575, %v652
    %v654 = vpop.f32.mrf.mxu0
    %655 = vmatprep.mubr.f32.mxu0 0.0
    %656 = vmatmul.mubr.f32.gmra.mxu0 %v53
    %v657 = vpop.f32.mrf.mxu0
    %v658 = vadd.f32 %v575, %v657
    %v659 = vpop.f32.mrf.mxu0
    %660 = vmatprep.mubr.f32.mxu0 0.0
    %661 = vmatmul.mubr.f32.gmra.mxu0 %v54
    %v662 = vpop.f32.mrf.mxu0
    %v663 = vadd.f32 %v575, %v662
    %v664 = vpop.f32.mrf.mxu0
    %665 = vmatprep.mubr.f32.mxu0 0.0
    %666 = vmatmul.mubr.f32.gmra.mxu0 %v55
    %v667 = vpop.f32.mrf.mxu0
    %v668 = vadd.f32 %v575, %v667
    %v669 = vpop.f32.mrf.mxu0
    %670 = vmatprep.mubr.f32.mxu0 0.0
    %671 = vmatmul.mubr.f32.gmra.mxu0 %v56
    %v672 = vpop.f32.mrf.mxu0
    %v673 = vadd.f32 %v575, %v672
    %v674 = vpop.f32.mrf.mxu0
    %675 = vmatprep.mubr.f32.mxu0 0.0
    %676 = vmatmul.mubr.f32.gmra.mxu0 %v57
    %v677 = vpop.f32.mrf.mxu0
    %v678 = vadd.f32 %v575, %v677
    %v679 = vpop.f32.mrf.mxu0
    %680 = vmatprep.mubr.f32.mxu0 0.0
    %681 = vmatmul.mubr.f32.gmra.mxu0 %v58
    %v682 = vpop.f32.mrf.mxu0
    %v683 = vadd.f32 %v575, %v682
    %v684 = vpop.f32.mrf.mxu0
    %685 = vmatprep.mubr.f32.mxu0 0.0
    %686 = vmatmul.mubr.f32.gmra.mxu0 %v59
    %v687 = vpop.f32.mrf.mxu0
    %v688 = vadd.f32 %v575, %v687
    %v689 = vpop.f32.mrf.mxu0
    %690 = vmatprep.mubr.f32.mxu0 0.0
    %691 = vmatmul.mubr.f32.gmra.mxu0 %v60
    %v692 = vpop.f32.mrf.mxu0
    %v693 = vadd.f32 %v575, %v692
    %v694 = vpop.f32.mrf.mxu0
    %695 = vmatprep.mubr.f32.mxu0 0.0
    %696 = vmatmul.mubr.f32.gmra.mxu0 %v61
    %v697 = vpop.f32.mrf.mxu0
    %v698 = vadd.f32 %v575, %v697
    %v699 = vpop.f32.mrf.mxu0
    %700 = vmatprep.mubr.f32.mxu0 0.0
    %701 = vmatmul.mubr.f32.gmra.mxu0 %v62
    %v702 = vpop.f32.mrf.mxu0
    %v703 = vadd.f32 %v575, %v702
    %v704 = vpop.f32.mrf.mxu0
    %705 = vmatprep.mubr.f32.mxu0 0.0
    %706 = vmatmul.mubr.f32.gmra.mxu0 %v63
    %v707 = vpop.f32.mrf.mxu0
    %v708 = vadd.f32 %v575, %v707
    %v709 = vpop.f32.mrf.mxu0
    %710 = vmatprep.mubr.f32.mxu0 0.0
    %711 = vmatmul.mubr.f32.gmra.mxu0 %v64
    %v712 = vpop.f32.mrf.mxu0
    %v713 = vadd.f32 %v575, %v712
    %v714 = vpop.f32.mrf.mxu0
    %715 = vmatprep.mubr.f32.mxu0 0.0
    %716 = vmatmul.mubr.f32.gmra.mxu0 %v65
    %v717 = vpop.f32.mrf.mxu0
    %v718 = vadd.f32 %v575, %v717
    %v719 = vpop.f32.mrf.mxu0
    %720 = vdwg.mxu0
    %v721 = vmax.f32 %v643, 0.0
    %v722 = vmax.f32 %v648, 0.0
    %v723 = vmax.f32 %v653, 0.0
    %v724 = vmax.f32 %v658, 0.0
    %v725 = vmax.f32 %v663, 0.0
    %v726 = vmax.f32 %v668, 0.0
    %v727 = vmax.f32 %v673, 0.0
    %v728 = vmax.f32 %v678, 0.0
    %v729 = vmax.f32 %v683, 0.0
    %v730 = vmax.f32 %v688, 0.0
    %v731 = vmax.f32 %v693, 0.0
    %v732 = vmax.f32 %v698, 0.0
    %v733 = vmax.f32 %v703, 0.0
    %v734 = vmax.f32 %v708, 0.0
    %v735 = vmax.f32 %v713, 0.0
    %v736 = vmax.f32 %v718, 0.0
    %s737 = scalar_lea.vmem [#allocation2], 256
    %v738 = vld [vmem:[%s737] sm:$0xff]
    %v739 = vld [vmem:[%s737 + $0x8] sm:$0xff]
    %v740 = vld [vmem:[%s737 + $0x10] sm:$0xff]
    %v741 = vld [vmem:[%s737 + $0x18] sm:$0xff]
    %v742 = vld [vmem:[%s737 + $0x20] sm:$0xff]
    %v743 = vld [vmem:[%s737 + $0x28] sm:$0xff]
    %v744 = vld [vmem:[%s737 + $0x30] sm:$0xff]
    %v745 = vld [vmem:[%s737 + $0x38] sm:$0xff]
    %v746 = vld [vmem:[%s737 + $0x40] sm:$0xff]
    %v747 = vld [vmem:[%s737 + $0x48] sm:$0xff]
    %v748 = vld [vmem:[%s737 + $0x50] sm:$0xff]
    %v749 = vld [vmem:[%s737 + $0x58] sm:$0xff]
    %v750 = vld [vmem:[%s737 + $0x60] sm:$0xff]
    %v751 = vld [vmem:[%s737 + $0x68] sm:$0xff]
    %v752 = vld [vmem:[%s737 + $0x70] sm:$0xff]
    %v753 = vld [vmem:[%s737 + $0x78] sm:$0xff]
    %v754 = vld [vmem:[%s3 + $0x2] sm:$0x1]
    %755 = vmatprep.subr.mxu0 0.0
    %756 = vmatpush1.msra.mxu0 %v753
    %757 = vmatprep.subr.mxu0 0.0
    %758 = vmatpush1.msra.mxu0 %v752
    %759 = vmatprep.subr.mxu0 0.0
    %760 = vmatpush1.msra.mxu0 %v751
    %761 = vmatprep.subr.mxu0 0.0
    %762 = vmatpush1.msra.mxu0 %v750
    %763 = vmatprep.subr.mxu0 0.0
    %764 = vmatpush1.msra.mxu0 %v749
    %765 = vmatprep.subr.mxu0 0.0
    %766 = vmatpush1.msra.mxu0 %v748
    %767 = vmatprep.subr.mxu0 0.0
    %768 = vmatpush1.msra.mxu0 %v747
    %769 = vmatprep.subr.mxu0 0.0
    %770 = vmatpush1.msra.mxu0 %v746
    %771 = vmatprep.subr.mxu0 0.0
    %772 = vmatpush1.msra.mxu0 %v745
    %773 = vmatprep.subr.mxu0 0.0
    %774 = vmatpush1.msra.mxu0 %v744
    %775 = vmatprep.subr.mxu0 0.0
    %776 = vmatpush1.msra.mxu0 %v743
    %777 = vmatprep.subr.mxu0 0.0
    %778 = vmatpush1.msra.mxu0 %v742
    %779 = vmatprep.subr.mxu0 0.0
    %780 = vmatpush1.msra.mxu0 %v741
    %781 = vmatprep.subr.mxu0 0.0
    %782 = vmatpush1.msra.mxu0 %v740
    %783 = vmatprep.subr.mxu0 0.0
    %784 = vmatpush1.msra.mxu0 %v739
    %785 = vmatprep.subr.mxu0 0.0
    %786 = vmatpush1.msra.mxu0 %v738
    %787 = vmatprep.subr.mxu0 0.0
    %788 = vmatpush2.msra.mxu0 0.0
    %789 = vmatprep.subr.mxu0 0.0
    %790 = vmatpush2.msra.mxu0 0.0
    %791 = vmatprep.subr.mxu0 0.0
    %792 = vmatpush2.msra.mxu0 0.0
    %793 = vmatprep.subr.mxu0 0.0
    %794 = vmatpush2.msra.mxu0 0.0
    %795 = vmatprep.subr.mxu0 0.0
    %796 = vmatpush2.msra.mxu0 0.0
    %797 = vmatprep.subr.mxu0 0.0
    %798 = vmatpush2.msra.mxu0 0.0
    %799 = vmatprep.subr.mxu0 0.0
    %800 = vmatpush2.msra.mxu0 0.0
    %801 = vmatprep.subr.mxu0 0.0
    %802 = vmatpush2.msra.mxu0 0.0
    %803 = vmatprep.subr.mxu0 0.0
    %804 = vmatpush2.msra.mxu0 0.0
    %805 = vmatprep.subr.mxu0 0.0
    %806 = vmatpush2.msra.mxu0 0.0
    %807 = vmatprep.subr.mxu0 0.0
    %808 = vmatpush2.msra.mxu0 0.0
    %809 = vmatprep.subr.mxu0 0.0
    %810 = vmatpush2.msra.mxu0 0.0
    %811 = vmatprep.subr.mxu0 0.0
    %812 = vmatpush2.msra.mxu0 0.0
    %813 = vmatprep.subr.mxu0 0.0
    %814 = vmatpush2.msra.mxu0 0.0
    %815 = vmatprep.subr.mxu0 0.0
    %816 = vmatpush2.msra.mxu0 0.0
    %817 = vmatprep.subr.mxu0 0.0
    %818 = vmatpush2.msra.mxu0 0.0
    %819 = vmatprep.mubr.f32.mxu0 0.0
    %820 = vmatmul.mubr.f32.gmra.mxu0 %v721
    %v821 = vpop.f32.mrf.mxu0
    %v822 = vadd.f32 0.0, %v821
    %v823 = vpop.f32.mrf.mxu0
    %824 = vmatprep.mubr.f32.mxu0 0.0
    %825 = vmatmul.mubr.f32.gmra.mxu0 %v722
    %v826 = vpop.f32.mrf.mxu0
    %v827 = vadd.f32 0.0, %v826
    %v828 = vpop.f32.mrf.mxu0
    %829 = vmatprep.mubr.f32.mxu0 0.0
    %830 = vmatmul.mubr.f32.gmra.mxu0 %v723
    %v831 = vpop.f32.mrf.mxu0
    %v832 = vadd.f32 0.0, %v831
    %v833 = vpop.f32.mrf.mxu0
    %834 = vmatprep.mubr.f32.mxu0 0.0
    %835 = vmatmul.mubr.f32.gmra.mxu0 %v724
    %v836 = vpop.f32.mrf.mxu0
    %v837 = vadd.f32 0.0, %v836
    %v838 = vpop.f32.mrf.mxu0
    %839 = vmatprep.mubr.f32.mxu0 0.0
    %840 = vmatmul.mubr.f32.gmra.mxu0 %v725
    %v841 = vpop.f32.mrf.mxu0
    %v842 = vadd.f32 0.0, %v841
    %v843 = vpop.f32.mrf.mxu0
    %844 = vmatprep.mubr.f32.mxu0 0.0
    %845 = vmatmul.mubr.f32.gmra.mxu0 %v726
    %v846 = vpop.f32.mrf.mxu0
    %v847 = vadd.f32 0.0, %v846
    %v848 = vpop.f32.mrf.mxu0
    %849 = vmatprep.mubr.f32.mxu0 0.0
    %850 = vmatmul.mubr.f32.gmra.mxu0 %v727
    %v851 = vpop.f32.mrf.mxu0
    %v852 = vadd.f32 0.0, %v851
    %v853 = vpop.f32.mrf.mxu0
    %854 = vmatprep.mubr.f32.mxu0 0.0
    %855 = vmatmul.mubr.f32.gmra.mxu0 %v728
    %v856 = vpop.f32.mrf.mxu0
    %v857 = vadd.f32 0.0, %v856
    %v858 = vpop.f32.mrf.mxu0
    %859 = vmatprep.mubr.f32.mxu0 0.0
    %860 = vmatmul.mubr.f32.gmra.mxu0 %v729
    %v861 = vpop.f32.mrf.mxu0
    %v862 = vadd.f32 0.0, %v861
    %v863 = vpop.f32.mrf.mxu0
    %864 = vmatprep.mubr.f32.mxu0 0.0
    %865 = vmatmul.mubr.f32.gmra.mxu0 %v730
    %v866 = vpop.f32.mrf.mxu0
    %v867 = vadd.f32 0.0, %v866
    %v868 = vpop.f32.mrf.mxu0
    %869 = vmatprep.mubr.f32.mxu0 0.0
    %870 = vmatmul.mubr.f32.gmra.mxu0 %v731
    %v871 = vpop.f32.mrf.mxu0
    %v872 = vadd.f32 0.0, %v871
    %v873 = vpop.f32.mrf.mxu0
    %874 = vmatprep.mubr.f32.mxu0 0.0
    %875 = vmatmul.mubr.f32.gmra.mxu0 %v732
    %v876 = vpop.f32.mrf.mxu0
    %v877 = vadd.f32 0.0, %v876
    %v878 = vpop.f32.mrf.mxu0
    %879 = vmatprep.mubr.f32.mxu0 0.0
    %880 = vmatmul.mubr.f32.gmra.mxu0 %v733
    %v881 = vpop.f32.mrf.mxu0
    %v882 = vadd.f32 0.0, %v881
    %v883 = vpop.f32.mrf.mxu0
    %884 = vmatprep.mubr.f32.mxu0 0.0
    %885 = vmatmul.mubr.f32.gmra.mxu0 %v734
    %v886 = vpop.f32.mrf.mxu0
    %v887 = vadd.f32 0.0, %v886
    %v888 = vpop.f32.mrf.mxu0
    %889 = vmatprep.mubr.f32.mxu0 0.0
    %890 = vmatmul.mubr.f32.gmra.mxu0 %v735
    %v891 = vpop.f32.mrf.mxu0
    %v892 = vadd.f32 0.0, %v891
    %v893 = vpop.f32.mrf.mxu0
    %894 = vmatprep.mubr.f32.mxu0 0.0
    %895 = vmatmul.mubr.f32.gmra.mxu0 %v736
    %v896 = vpop.f32.mrf.mxu0
    %v897 = vadd.f32 0.0, %v896
    %v898 = vpop.f32.mrf.mxu0
    %899 = vdwg.mxu0
    %v900 = vlaneseq
    %v901 = vshrl.u32 %v900, 7
    %v902 = vsub.s32 0, %v901
    %v903 = vrot.slane %v754, %v902
    %904 = vmatprep.subr.mxu0 0.0
    %905 = vmatpush1.msra.mxu0 %v897
    %906 = vmatprep.subr.mxu0 0.0
    %907 = vmatpush1.msra.mxu0 %v892
    %908 = vmatprep.subr.mxu0 0.0
    %909 = vmatpush1.msra.mxu0 %v887
    %910 = vmatprep.subr.mxu0 0.0
    %911 = vmatpush1.msra.mxu0 %v882
    %912 = vmatprep.subr.mxu0 0.0
    %913 = vmatpush1.msra.mxu0 %v877
    %914 = vmatprep.subr.mxu0 0.0
    %915 = vmatpush1.msra.mxu0 %v872
    %916 = vmatprep.subr.mxu0 0.0
    %917 = vmatpush1.msra.mxu0 %v867
    %918 = vmatprep.subr.mxu0 0.0
    %919 = vmatpush1.msra.mxu0 %v862
    %920 = vmatprep.subr.mxu0 0.0
    %921 = vmatpush1.msra.mxu0 %v857
    %922 = vmatprep.subr.mxu0 0.0
    %923 = vmatpush1.msra.mxu0 %v852
    %924 = vmatprep.subr.mxu0 0.0
    %925 = vmatpush1.msra.mxu0 %v847
    %926 = vmatprep.subr.mxu0 0.0
    %927 = vmatpush1.msra.mxu0 %v842
    %928 = vmatprep.subr.mxu0 0.0
    %929 = vmatpush1.msra.mxu0 %v837
    %930 = vmatprep.subr.mxu0 0.0
    %931 = vmatpush1.msra.mxu0 %v832
    %932 = vmatprep.subr.mxu0 0.0
    %933 = vmatpush1.msra.mxu0 %v827
    %934 = vmatprep.subr.mxu0 0.0
    %935 = vmatpush1.msra.mxu0 %v822
    %936 = vmatprep.subr.mxu0 0.0
    %937 = vmatpush2.msra.mxu0 0.0
    %938 = vmatprep.subr.mxu0 0.0
    %939 = vmatpush2.msra.mxu0 0.0
    %940 = vmatprep.subr.mxu0 0.0
    %941 = vmatpush2.msra.mxu0 0.0
    %942 = vmatprep.subr.mxu0 0.0
    %943 = vmatpush2.msra.mxu0 0.0
    %944 = vmatprep.subr.mxu0 0.0
    %945 = vmatpush2.msra.mxu0 0.0
    %946 = vmatprep.subr.mxu0 0.0
    %947 = vmatpush2.msra.mxu0 0.0
    %948 = vmatprep.subr.mxu0 0.0
    %949 = vmatpush2.msra.mxu0 0.0
    %950 = vmatprep.subr.mxu0 0.0
    %951 = vmatpush2.msra.mxu0 0.0
    %952 = vmatprep.subr.mxu0 0.0
    %953 = vmatpush2.msra.mxu0 0.0
    %954 = vmatprep.subr.mxu0 0.0
    %955 = vmatpush2.msra.mxu0 0.0
    %956 = vmatprep.subr.mxu0 0.0
    %957 = vmatpush2.msra.mxu0 0.0
    %958 = vmatprep.subr.mxu0 0.0
    %959 = vmatpush2.msra.mxu0 0.0
    %960 = vmatprep.subr.mxu0 0.0
    %961 = vmatpush2.msra.mxu0 0.0
    %962 = vmatprep.subr.mxu0 0.0
    %963 = vmatpush2.msra.mxu0 0.0
    %964 = vmatprep.subr.mxu0 0.0
    %965 = vmatpush2.msra.mxu0 0.0
    %966 = vmatprep.subr.mxu0 0.0
    %967 = vmatpush2.msra.mxu0 0.0
    %968 = vmatprep.mubr.f32.mxu0 0.0
    %969 = vmatmul.mubr.f32.gmra.mxu0 %v50
    %v970 = vpop.f32.mrf.mxu0
    %v971 = vadd.f32 %v903, %v970
    %v972 = vpop.f32.mrf.mxu0
    %973 = vmatprep.mubr.f32.mxu0 0.0
    %974 = vmatmul.mubr.f32.gmra.mxu0 %v51
    %v975 = vpop.f32.mrf.mxu0
    %v976 = vadd.f32 %v903, %v975
    %v977 = vpop.f32.mrf.mxu0
    %978 = vmatprep.mubr.f32.mxu0 0.0
    %979 = vmatmul.mubr.f32.gmra.mxu0 %v52
    %v980 = vpop.f32.mrf.mxu0
    %v981 = vadd.f32 %v903, %v980
    %v982 = vpop.f32.mrf.mxu0
    %983 = vmatprep.mubr.f32.mxu0 0.0
    %984 = vmatmul.mubr.f32.gmra.mxu0 %v53
    %v985 = vpop.f32.mrf.mxu0
    %v986 = vadd.f32 %v903, %v985
    %v987 = vpop.f32.mrf.mxu0
    %988 = vmatprep.mubr.f32.mxu0 0.0
    %989 = vmatmul.mubr.f32.gmra.mxu0 %v54
    %v990 = vpop.f32.mrf.mxu0
    %v991 = vadd.f32 %v903, %v990
    %v992 = vpop.f32.mrf.mxu0
    %993 = vmatprep.mubr.f32.mxu0 0.0
    %994 = vmatmul.mubr.f32.gmra.mxu0 %v55
    %v995 = vpop.f32.mrf.mxu0
    %v996 = vadd.f32 %v903, %v995
    %v997 = vpop.f32.mrf.mxu0
    %998 = vmatprep.mubr.f32.mxu0 0.0
    %999 = vmatmul.mubr.f32.gmra.mxu0 %v56
    %v1000 = vpop.f32.mrf.mxu0
    %v1001 = vadd.f32 %v903, %v1000
    %v1002 = vpop.f32.mrf.mxu0
    %1003 = vmatprep.mubr.f32.mxu0 0.0
    %1004 = vmatmul.mubr.f32.gmra.mxu0 %v57
    %v1005 = vpop.f32.mrf.mxu0
    %v1006 = vadd.f32 %v903, %v1005
    %v1007 = vpop.f32.mrf.mxu0
    %1008 = vmatprep.mubr.f32.mxu0 0.0
    %1009 = vmatmul.mubr.f32.gmra.mxu0 %v58
    %v1010 = vpop.f32.mrf.mxu0
    %v1011 = vadd.f32 %v903, %v1010
    %v1012 = vpop.f32.mrf.mxu0
    %1013 = vmatprep.mubr.f32.mxu0 0.0
    %1014 = vmatmul.mubr.f32.gmra.mxu0 %v59
    %v1015 = vpop.f32.mrf.mxu0
    %v1016 = vadd.f32 %v903, %v1015
    %v1017 = vpop.f32.mrf.mxu0
    %1018 = vmatprep.mubr.f32.mxu0 0.0
    %1019 = vmatmul.mubr.f32.gmra.mxu0 %v60
    %v1020 = vpop.f32.mrf.mxu0
    %v1021 = vadd.f32 %v903, %v1020
    %v1022 = vpop.f32.mrf.mxu0
    %1023 = vmatprep.mubr.f32.mxu0 0.0
    %1024 = vmatmul.mubr.f32.gmra.mxu0 %v61
    %v1025 = vpop.f32.mrf.mxu0
    %v1026 = vadd.f32 %v903, %v1025
    %v1027 = vpop.f32.mrf.mxu0
    %1028 = vmatprep.mubr.f32.mxu0 0.0
    %1029 = vmatmul.mubr.f32.gmra.mxu0 %v62
    %v1030 = vpop.f32.mrf.mxu0
    %v1031 = vadd.f32 %v903, %v1030
    %v1032 = vpop.f32.mrf.mxu0
    %1033 = vmatprep.mubr.f32.mxu0 0.0
    %1034 = vmatmul.mubr.f32.gmra.mxu0 %v63
    %v1035 = vpop.f32.mrf.mxu0
    %v1036 = vadd.f32 %v903, %v1035
    %v1037 = vpop.f32.mrf.mxu0
    %1038 = vmatprep.mubr.f32.mxu0 0.0
    %1039 = vmatmul.mubr.f32.gmra.mxu0 %v64
    %v1040 = vpop.f32.mrf.mxu0
    %v1041 = vadd.f32 %v903, %v1040
    %v1042 = vpop.f32.mrf.mxu0
    %1043 = vmatprep.mubr.f32.mxu0 0.0
    %1044 = vmatmul.mubr.f32.gmra.mxu0 %v65
    %v1045 = vpop.f32.mrf.mxu0
    %v1046 = vadd.f32 %v903, %v1045
    %v1047 = vpop.f32.mrf.mxu0
    %1048 = vdwg.mxu0
    %v1049 = vmax.f32 %v971, 0.0
    %v1050 = vmax.f32 %v976, 0.0
    %v1051 = vmax.f32 %v981, 0.0
    %v1052 = vmax.f32 %v986, 0.0
    %v1053 = vmax.f32 %v991, 0.0
    %v1054 = vmax.f32 %v996, 0.0
    %v1055 = vmax.f32 %v1001, 0.0
    %v1056 = vmax.f32 %v1006, 0.0
    %v1057 = vmax.f32 %v1011, 0.0
    %v1058 = vmax.f32 %v1016, 0.0
    %v1059 = vmax.f32 %v1021, 0.0
    %v1060 = vmax.f32 %v1026, 0.0
    %v1061 = vmax.f32 %v1031, 0.0
    %v1062 = vmax.f32 %v1036, 0.0
    %v1063 = vmax.f32 %v1041, 0.0
    %v1064 = vmax.f32 %v1046, 0.0
    %s1065 = scalar_lea.vmem [#allocation2], 384
    %v1066 = vld [vmem:[%s1065] sm:$0xff]
    %v1067 = vld [vmem:[%s1065 + $0x8] sm:$0xff]
    %v1068 = vld [vmem:[%s1065 + $0x10] sm:$0xff]
    %v1069 = vld [vmem:[%s1065 + $0x18] sm:$0xff]
    %v1070 = vld [vmem:[%s1065 + $0x20] sm:$0xff]
    %v1071 = vld [vmem:[%s1065 + $0x28] sm:$0xff]
    %v1072 = vld [vmem:[%s1065 + $0x30] sm:$0xff]
    %v1073 = vld [vmem:[%s1065 + $0x38] sm:$0xff]
    %v1074 = vld [vmem:[%s1065 + $0x40] sm:$0xff]
    %v1075 = vld [vmem:[%s1065 + $0x48] sm:$0xff]
    %v1076 = vld [vmem:[%s1065 + $0x50] sm:$0xff]
    %v1077 = vld [vmem:[%s1065 + $0x58] sm:$0xff]
    %v1078 = vld [vmem:[%s1065 + $0x60] sm:$0xff]
    %v1079 = vld [vmem:[%s1065 + $0x68] sm:$0xff]
    %v1080 = vld [vmem:[%s1065 + $0x70] sm:$0xff]
    %v1081 = vld [vmem:[%s1065 + $0x78] sm:$0xff]
    %v1082 = vld [vmem:[%s3 + $0x3] sm:$0x1]
    %1083 = vmatprep.subr.mxu0 0.0
    %1084 = vmatpush1.msra.mxu0 %v1081
    %1085 = vmatprep.subr.mxu0 0.0
    %1086 = vmatpush1.msra.mxu0 %v1080
    %1087 = vmatprep.subr.mxu0 0.0
    %1088 = vmatpush1.msra.mxu0 %v1079
    %1089 = vmatprep.subr.mxu0 0.0
    %1090 = vmatpush1.msra.mxu0 %v1078
    %1091 = vmatprep.subr.mxu0 0.0
    %1092 = vmatpush1.msra.mxu0 %v1077
    %1093 = vmatprep.subr.mxu0 0.0
    %1094 = vmatpush1.msra.mxu0 %v1076
    %1095 = vmatprep.subr.mxu0 0.0
    %1096 = vmatpush1.msra.mxu0 %v1075
    %1097 = vmatprep.subr.mxu0 0.0
    %1098 = vmatpush1.msra.mxu0 %v1074
    %1099 = vmatprep.subr.mxu0 0.0
    %1100 = vmatpush1.msra.mxu0 %v1073
    %1101 = vmatprep.subr.mxu0 0.0
    %1102 = vmatpush1.msra.mxu0 %v1072
    %1103 = vmatprep.subr.mxu0 0.0
    %1104 = vmatpush1.msra.mxu0 %v1071
    %1105 = vmatprep.subr.mxu0 0.0
    %1106 = vmatpush1.msra.mxu0 %v1070
    %1107 = vmatprep.subr.mxu0 0.0
    %1108 = vmatpush1.msra.mxu0 %v1069
    %1109 = vmatprep.subr.mxu0 0.0
    %1110 = vmatpush1.msra.mxu0 %v1068
    %1111 = vmatprep.subr.mxu0 0.0
    %1112 = vmatpush1.msra.mxu0 %v1067
    %1113 = vmatprep.subr.mxu0 0.0
    %1114 = vmatpush1.msra.mxu0 %v1066
    %1115 = vmatprep.subr.mxu0 0.0
    %1116 = vmatpush2.msra.mxu0 0.0
    %1117 = vmatprep.subr.mxu0 0.0
    %1118 = vmatpush2.msra.mxu0 0.0
    %1119 = vmatprep.subr.mxu0 0.0
    %1120 = vmatpush2.msra.mxu0 0.0
    %1121 = vmatprep.subr.mxu0 0.0
    %1122 = vmatpush2.msra.mxu0 0.0
    %1123 = vmatprep.subr.mxu0 0.0
    %1124 = vmatpush2.msra.mxu0 0.0
    %1125 = vmatprep.subr.mxu0 0.0
    %1126 = vmatpush2.msra.mxu0 0.0
    %1127 = vmatprep.subr.mxu0 0.0
    %1128 = vmatpush2.msra.mxu0 0.0
    %1129 = vmatprep.subr.mxu0 0.0
    %1130 = vmatpush2.msra.mxu0 0.0
    %1131 = vmatprep.subr.mxu0 0.0
    %1132 = vmatpush2.msra.mxu0 0.0
    %1133 = vmatprep.subr.mxu0 0.0
    %1134 = vmatpush2.msra.mxu0 0.0
    %1135 = vmatprep.subr.mxu0 0.0
    %1136 = vmatpush2.msra.mxu0 0.0
    %1137 = vmatprep.subr.mxu0 0.0
    %1138 = vmatpush2.msra.mxu0 0.0
    %1139 = vmatprep.subr.mxu0 0.0
    %1140 = vmatpush2.msra.mxu0 0.0
    %1141 = vmatprep.subr.mxu0 0.0
    %1142 = vmatpush2.msra.mxu0 0.0
    %1143 = vmatprep.subr.mxu0 0.0
    %1144 = vmatpush2.msra.mxu0 0.0
    %1145 = vmatprep.subr.mxu0 0.0
    %1146 = vmatpush2.msra.mxu0 0.0
    %1147 = vmatprep.mubr.f32.mxu0 0.0
    %1148 = vmatmul.mubr.f32.gmra.mxu0 %v1049
    %v1149 = vpop.f32.mrf.mxu0
    %v1150 = vadd.f32 0.0, %v1149
    %v1151 = vpop.f32.mrf.mxu0
    %1152 = vmatprep.mubr.f32.mxu0 0.0
    %1153 = vmatmul.mubr.f32.gmra.mxu0 %v1050
    %v1154 = vpop.f32.mrf.mxu0
    %v1155 = vadd.f32 0.0, %v1154
    %v1156 = vpop.f32.mrf.mxu0
    %1157 = vmatprep.mubr.f32.mxu0 0.0
    %1158 = vmatmul.mubr.f32.gmra.mxu0 %v1051
    %v1159 = vpop.f32.mrf.mxu0
    %v1160 = vadd.f32 0.0, %v1159
    %v1161 = vpop.f32.mrf.mxu0
    %1162 = vmatprep.mubr.f32.mxu0 0.0
    %1163 = vmatmul.mubr.f32.gmra.mxu0 %v1052
    %v1164 = vpop.f32.mrf.mxu0
    %v1165 = vadd.f32 0.0, %v1164
    %v1166 = vpop.f32.mrf.mxu0
    %1167 = vmatprep.mubr.f32.mxu0 0.0
    %1168 = vmatmul.mubr.f32.gmra.mxu0 %v1053
    %v1169 = vpop.f32.mrf.mxu0
    %v1170 = vadd.f32 0.0, %v1169
    %v1171 = vpop.f32.mrf.mxu0
    %1172 = vmatprep.mubr.f32.mxu0 0.0
    %1173 = vmatmul.mubr.f32.gmra.mxu0 %v1054
    %v1174 = vpop.f32.mrf.mxu0
    %v1175 = vadd.f32 0.0, %v1174
    %v1176 = vpop.f32.mrf.mxu0
    %1177 = vmatprep.mubr.f32.mxu0 0.0
    %1178 = vmatmul.mubr.f32.gmra.mxu0 %v1055
    %v1179 = vpop.f32.mrf.mxu0
    %v1180 = vadd.f32 0.0, %v1179
    %v1181 = vpop.f32.mrf.mxu0
    %1182 = vmatprep.mubr.f32.mxu0 0.0
    %1183 = vmatmul.mubr.f32.gmra.mxu0 %v1056
    %v1184 = vpop.f32.mrf.mxu0
    %v1185 = vadd.f32 0.0, %v1184
    %v1186 = vpop.f32.mrf.mxu0
    %1187 = vmatprep.mubr.f32.mxu0 0.0
    %1188 = vmatmul.mubr.f32.gmra.mxu0 %v1057
    %v1189 = vpop.f32.mrf.mxu0
    %v1190 = vadd.f32 0.0, %v1189
    %v1191 = vpop.f32.mrf.mxu0
    %1192 = vmatprep.mubr.f32.mxu0 0.0
    %1193 = vmatmul.mubr.f32.gmra.mxu0 %v1058
    %v1194 = vpop.f32.mrf.mxu0
    %v1195 = vadd.f32 0.0, %v1194
    %v1196 = vpop.f32.mrf.mxu0
    %1197 = vmatprep.mubr.f32.mxu0 0.0
    %1198 = vmatmul.mubr.f32.gmra.mxu0 %v1059
    %v1199 = vpop.f32.mrf.mxu0
    %v1200 = vadd.f32 0.0, %v1199
    %v1201 = vpop.f32.mrf.mxu0
    %1202 = vmatprep.mubr.f32.mxu0 0.0
    %1203 = vmatmul.mubr.f32.gmra.mxu0 %v1060
    %v1204 = vpop.f32.mrf.mxu0
    %v1205 = vadd.f32 0.0, %v1204
    %v1206 = vpop.f32.mrf.mxu0
    %1207 = vmatprep.mubr.f32.mxu0 0.0
    %1208 = vmatmul.mubr.f32.gmra.mxu0 %v1061
    %v1209 = vpop.f32.mrf.mxu0
    %v1210 = vadd.f32 0.0, %v1209
    %v1211 = vpop.f32.mrf.mxu0
    %1212 = vmatprep.mubr.f32.mxu0 0.0
    %1213 = vmatmul.mubr.f32.gmra.mxu0 %v1062
    %v1214 = vpop.f32.mrf.mxu0
    %v1215 = vadd.f32 0.0, %v1214
    %v1216 = vpop.f32.mrf.mxu0
    %1217 = vmatprep.mubr.f32.mxu0 0.0
    %1218 = vmatmul.mubr.f32.gmra.mxu0 %v1063
    %v1219 = vpop.f32.mrf.mxu0
    %v1220 = vadd.f32 0.0, %v1219
    %v1221 = vpop.f32.mrf.mxu0
    %1222 = vmatprep.mubr.f32.mxu0 0.0
    %1223 = vmatmul.mubr.f32.gmra.mxu0 %v1064
    %v1224 = vpop.f32.mrf.mxu0
    %v1225 = vadd.f32 0.0, %v1224
    %v1226 = vpop.f32.mrf.mxu0
    %1227 = vdwg.mxu0
    %v1228 = vlaneseq
    %v1229 = vshrl.u32 %v1228, 7
    %v1230 = vsub.s32 0, %v1229
    %v1231 = vrot.slane %v1082, %v1230
    %1232 = vmatprep.subr.mxu0 0.0
    %1233 = vmatpush1.msra.mxu0 %v1225
    %1234 = vmatprep.subr.mxu0 0.0
    %1235 = vmatpush1.msra.mxu0 %v1220
    %1236 = vmatprep.subr.mxu0 0.0
    %1237 = vmatpush1.msra.mxu0 %v1215
    %1238 = vmatprep.subr.mxu0 0.0
    %1239 = vmatpush1.msra.mxu0 %v1210
    %1240 = vmatprep.subr.mxu0 0.0
    %1241 = vmatpush1.msra.mxu0 %v1205
    %1242 = vmatprep.subr.mxu0 0.0
    %1243 = vmatpush1.msra.mxu0 %v1200
    %1244 = vmatprep.subr.mxu0 0.0
    %1245 = vmatpush1.msra.mxu0 %v1195
    %1246 = vmatprep.subr.mxu0 0.0
    %1247 = vmatpush1.msra.mxu0 %v1190
    %1248 = vmatprep.subr.mxu0 0.0
    %1249 = vmatpush1.msra.mxu0 %v1185
    %1250 = vmatprep.subr.mxu0 0.0
    %1251 = vmatpush1.msra.mxu0 %v1180
    %1252 = vmatprep.subr.mxu0 0.0
    %1253 = vmatpush1.msra.mxu0 %v1175
    %1254 = vmatprep.subr.mxu0 0.0
    %1255 = vmatpush1.msra.mxu0 %v1170
    %1256 = vmatprep.subr.mxu0 0.0
    %1257 = vmatpush1.msra.mxu0 %v1165
    %1258 = vmatprep.subr.mxu0 0.0
    %1259 = vmatpush1.msra.mxu0 %v1160
    %1260 = vmatprep.subr.mxu0 0.0
    %1261 = vmatpush1.msra.mxu0 %v1155
    %1262 = vmatprep.subr.mxu0 0.0
    %1263 = vmatpush1.msra.mxu0 %v1150
    %1264 = vmatprep.subr.mxu0 0.0
    %1265 = vmatpush2.msra.mxu0 0.0
    %1266 = vmatprep.subr.mxu0 0.0
    %1267 = vmatpush2.msra.mxu0 0.0
    %1268 = vmatprep.subr.mxu0 0.0
    %1269 = vmatpush2.msra.mxu0 0.0
    %1270 = vmatprep.subr.mxu0 0.0
    %1271 = vmatpush2.msra.mxu0 0.0
    %1272 = vmatprep.subr.mxu0 0.0
    %1273 = vmatpush2.msra.mxu0 0.0
    %1274 = vmatprep.subr.mxu0 0.0
    %1275 = vmatpush2.msra.mxu0 0.0
    %1276 = vmatprep.subr.mxu0 0.0
    %1277 = vmatpush2.msra.mxu0 0.0
    %1278 = vmatprep.subr.mxu0 0.0
    %1279 = vmatpush2.msra.mxu0 0.0
    %1280 = vmatprep.subr.mxu0 0.0
    %1281 = vmatpush2.msra.mxu0 0.0
    %1282 = vmatprep.subr.mxu0 0.0
    %1283 = vmatpush2.msra.mxu0 0.0
    %1284 = vmatprep.subr.mxu0 0.0
    %1285 = vmatpush2.msra.mxu0 0.0
    %1286 = vmatprep.subr.mxu0 0.0
    %1287 = vmatpush2.msra.mxu0 0.0
    %1288 = vmatprep.subr.mxu0 0.0
    %1289 = vmatpush2.msra.mxu0 0.0
    %1290 = vmatprep.subr.mxu0 0.0
    %1291 = vmatpush2.msra.mxu0 0.0
    %1292 = vmatprep.subr.mxu0 0.0
    %1293 = vmatpush2.msra.mxu0 0.0
    %1294 = vmatprep.subr.mxu0 0.0
    %1295 = vmatpush2.msra.mxu0 0.0
    %1296 = vmatprep.mubr.f32.mxu0 0.0
    %1297 = vmatmul.mubr.f32.gmra.mxu0 %v50
    %v1298 = vpop.f32.mrf.mxu0
    %v1299 = vadd.f32 %v1231, %v1298
    %v1300 = vpop.f32.mrf.mxu0
    %1301 = vmatprep.mubr.f32.mxu0 0.0
    %1302 = vmatmul.mubr.f32.gmra.mxu0 %v51
    %v1303 = vpop.f32.mrf.mxu0
    %v1304 = vadd.f32 %v1231, %v1303
    %v1305 = vpop.f32.mrf.mxu0
    %1306 = vmatprep.mubr.f32.mxu0 0.0
    %1307 = vmatmul.mubr.f32.gmra.mxu0 %v52
    %v1308 = vpop.f32.mrf.mxu0
    %v1309 = vadd.f32 %v1231, %v1308
    %v1310 = vpop.f32.mrf.mxu0
    %1311 = vmatprep.mubr.f32.mxu0 0.0
    %1312 = vmatmul.mubr.f32.gmra.mxu0 %v53
    %v1313 = vpop.f32.mrf.mxu0
    %v1314 = vadd.f32 %v1231, %v1313
    %v1315 = vpop.f32.mrf.mxu0
    %1316 = vmatprep.mubr.f32.mxu0 0.0
    %1317 = vmatmul.mubr.f32.gmra.mxu0 %v54
    %v1318 = vpop.f32.mrf.mxu0
    %v1319 = vadd.f32 %v1231, %v1318
    %v1320 = vpop.f32.mrf.mxu0
    %1321 = vmatprep.mubr.f32.mxu0 0.0
    %1322 = vmatmul.mubr.f32.gmra.mxu0 %v55
    %v1323 = vpop.f32.mrf.mxu0
    %v1324 = vadd.f32 %v1231, %v1323
    %v1325 = vpop.f32.mrf.mxu0
    %1326 = vmatprep.mubr.f32.mxu0 0.0
    %1327 = vmatmul.mubr.f32.gmra.mxu0 %v56
    %v1328 = vpop.f32.mrf.mxu0
    %v1329 = vadd.f32 %v1231, %v1328
    %v1330 = vpop.f32.mrf.mxu0
    %1331 = vmatprep.mubr.f32.mxu0 0.0
    %1332 = vmatmul.mubr.f32.gmra.mxu0 %v57
    %v1333 = vpop.f32.mrf.mxu0
    %v1334 = vadd.f32 %v1231, %v1333
    %v1335 = vpop.f32.mrf.mxu0
    %1336 = vmatprep.mubr.f32.mxu0 0.0
    %1337 = vmatmul.mubr.f32.gmra.mxu0 %v58
    %v1338 = vpop.f32.mrf.mxu0
    %v1339 = vadd.f32 %v1231, %v1338
    %v1340 = vpop.f32.mrf.mxu0
    %1341 = vmatprep.mubr.f32.mxu0 0.0
    %1342 = vmatmul.mubr.f32.gmra.mxu0 %v59
    %v1343 = vpop.f32.mrf.mxu0
    %v1344 = vadd.f32 %v1231, %v1343
    %v1345 = vpop.f32.mrf.mxu0
    %1346 = vmatprep.mubr.f32.mxu0 0.0
    %1347 = vmatmul.mubr.f32.gmra.mxu0 %v60
    %v1348 = vpop.f32.mrf.mxu0
    %v1349 = vadd.f32 %v1231, %v1348
    %v1350 = vpop.f32.mrf.mxu0
    %1351 = vmatprep.mubr.f32.mxu0 0.0
    %1352 = vmatmul.mubr.f32.gmra.mxu0 %v61
    %v1353 = vpop.f32.mrf.mxu0
    %v1354 = vadd.f32 %v1231, %v1353
    %v1355 = vpop.f32.mrf.mxu0
    %1356 = vmatprep.mubr.f32.mxu0 0.0
    %1357 = vmatmul.mubr.f32.gmra.mxu0 %v62
    %v1358 = vpop.f32.mrf.mxu0
    %v1359 = vadd.f32 %v1231, %v1358
    %v1360 = vpop.f32.mrf.mxu0
    %1361 = vmatprep.mubr.f32.mxu0 0.0
    %1362 = vmatmul.mubr.f32.gmra.mxu0 %v63
    %v1363 = vpop.f32.mrf.mxu0
    %v1364 = vadd.f32 %v1231, %v1363
    %v1365 = vpop.f32.mrf.mxu0
    %1366 = vmatprep.mubr.f32.mxu0 0.0
    %1367 = vmatmul.mubr.f32.gmra.mxu0 %v64
    %v1368 = vpop.f32.mrf.mxu0
    %v1369 = vadd.f32 %v1231, %v1368
    %v1370 = vpop.f32.mrf.mxu0
    %1371 = vmatprep.mubr.f32.mxu0 0.0
    %1372 = vmatmul.mubr.f32.gmra.mxu0 %v65
    %v1373 = vpop.f32.mrf.mxu0
    %v1374 = vadd.f32 %v1231, %v1373
    %v1375 = vpop.f32.mrf.mxu0
    %1376 = vdwg.mxu0
    %v1377 = vmax.f32 %v1299, 0.0
    %v1378 = vmax.f32 %v1304, 0.0
    %v1379 = vmax.f32 %v1309, 0.0
    %v1380 = vmax.f32 %v1314, 0.0
    %v1381 = vmax.f32 %v1319, 0.0
    %v1382 = vmax.f32 %v1324, 0.0
    %v1383 = vmax.f32 %v1329, 0.0
    %v1384 = vmax.f32 %v1334, 0.0
    %v1385 = vmax.f32 %v1339, 0.0
    %v1386 = vmax.f32 %v1344, 0.0
    %v1387 = vmax.f32 %v1349, 0.0
    %v1388 = vmax.f32 %v1354, 0.0
    %v1389 = vmax.f32 %v1359, 0.0
    %v1390 = vmax.f32 %v1364, 0.0
    %v1391 = vmax.f32 %v1369, 0.0
    %v1392 = vmax.f32 %v1374, 0.0
    %v1393 = vld [vmem:[%s4] sm:$0xff]
    %1394 = vmatprep.subr.mxu0 0.0
    %1395 = vmatpush1.msra.mxu0 %v1392
    %1396 = vmatprep.subr.mxu0 0.0
    %1397 = vmatpush1.msra.mxu0 %v1391
    %1398 = vmatprep.subr.mxu0 0.0
    %1399 = vmatpush1.msra.mxu0 %v1390
    %1400 = vmatprep.subr.mxu0 0.0
    %1401 = vmatpush1.msra.mxu0 %v1389
    %1402 = vmatprep.subr.mxu0 0.0
    %1403 = vmatpush1.msra.mxu0 %v1388
    %1404 = vmatprep.subr.mxu0 0.0
    %1405 = vmatpush1.msra.mxu0 %v1387
    %1406 = vmatprep.subr.mxu0 0.0
    %1407 = vmatpush1.msra.mxu0 %v1386
    %1408 = vmatprep.subr.mxu0 0.0
    %1409 = vmatpush1.msra.mxu0 %v1385
    %1410 = vmatprep.subr.mxu0 0.0
    %1411 = vmatpush1.msra.mxu0 %v1384
    %1412 = vmatprep.subr.mxu0 0.0
    %1413 = vmatpush1.msra.mxu0 %v1383
    %1414 = vmatprep.subr.mxu0 0.0
    %1415 = vmatpush1.msra.mxu0 %v1382
    %1416 = vmatprep.subr.mxu0 0.0
    %1417 = vmatpush1.msra.mxu0 %v1381
    %1418 = vmatprep.subr.mxu0 0.0
    %1419 = vmatpush1.msra.mxu0 %v1380
    %1420 = vmatprep.subr.mxu0 0.0
    %1421 = vmatpush1.msra.mxu0 %v1379
    %1422 = vmatprep.subr.mxu0 0.0
    %1423 = vmatpush1.msra.mxu0 %v1378
    %1424 = vmatprep.subr.mxu0 0.0
    %1425 = vmatpush1.msra.mxu0 %v1377
    %1426 = vmatprep.subr.mxu0 0.0
    %1427 = vmatpush2.msra.mxu0 0.0
    %1428 = vmatprep.subr.mxu0 0.0
    %1429 = vmatpush2.msra.mxu0 0.0
    %1430 = vmatprep.subr.mxu0 0.0
    %1431 = vmatpush2.msra.mxu0 0.0
    %1432 = vmatprep.subr.mxu0 0.0
    %1433 = vmatpush2.msra.mxu0 0.0
    %1434 = vmatprep.subr.mxu0 0.0
    %1435 = vmatpush2.msra.mxu0 0.0
    %1436 = vmatprep.subr.mxu0 0.0
    %1437 = vmatpush2.msra.mxu0 0.0
    %1438 = vmatprep.subr.mxu0 0.0
    %1439 = vmatpush2.msra.mxu0 0.0
    %1440 = vmatprep.subr.mxu0 0.0
    %1441 = vmatpush2.msra.mxu0 0.0
    %1442 = vmatprep.subr.mxu0 0.0
    %1443 = vmatpush2.msra.mxu0 0.0
    %1444 = vmatprep.subr.mxu0 0.0
    %1445 = vmatpush2.msra.mxu0 0.0
    %1446 = vmatprep.subr.mxu0 0.0
    %1447 = vmatpush2.msra.mxu0 0.0
    %1448 = vmatprep.subr.mxu0 0.0
    %1449 = vmatpush2.msra.mxu0 0.0
    %1450 = vmatprep.subr.mxu0 0.0
    %1451 = vmatpush2.msra.mxu0 0.0
    %1452 = vmatprep.subr.mxu0 0.0
    %1453 = vmatpush2.msra.mxu0 0.0
    %1454 = vmatprep.subr.mxu0 0.0
    %1455 = vmatpush2.msra.mxu0 0.0
    %1456 = vmatprep.subr.mxu0 0.0
    %1457 = vmatpush2.msra.mxu0 0.0
    %1458 = vmatprep.mubr.f32.mxu0 0.0
    %1459 = vmatmul.mubr.f32.gmra.mxu0 %v1393
    %v1460 = vpop.f32.mrf.mxu0
    %v1461 = vadd.f32 0.0, %v1460
    %v1462 = vpop.f32.mrf.mxu0
    %1463 = vdwg.mxu0
    %1464 = vst [vmem:[%s5] sm:$0xff] %v1461
    // Predicated region
    $region26: #{gcn_net1_forward.1} parent=1 // pred_check
      _
    $region27: #{gcn_net1_forward.1} parent=1 // pred_check_branch
      %1466 = sbr.rel (0) target = $region29
    $region28: #{gcn_net1_forward.1} parent=1 // pred_region
      _
    $region29: #{gcn_net1_forward.1} parent=1 // pred_fallthru
      _
    // Predicated region
    $region30: #{gcn_net1_forward.1} parent=1 // pred_check
      _
    $region31: #{gcn_net1_forward.1} parent=1 // pred_check_branch
      %1468 = sbr.rel (0) target = $region33
    $region32: #{gcn_net1_forward.1} parent=1 // pred_region
      _
    $region33: #{gcn_net1_forward.1} parent=1 // pred_fallthru
      _
    %1469 = vsyncpa [#allocation3], 1

</llo_original>
